<compile_context>
chip_gen: v6e
topology: v6e:2x2x1
jax: 0.10.0
libtpu: 0.0.40
codegen_flags: <defaults>
</compile_context>

<pallas_src>
import functools

import jax
import jax.numpy as jnp
from jax.experimental import pallas as pl
from jax.experimental.pallas import tpu as pltpu


def _round_up(x, m):
    return (x + m - 1) // m * m


def _sigmoid(x):
    # Numerically-stable sigmoid via tanh (EUP path); exact identity.
    return 0.5 * (jnp.tanh(0.5 * x) + 1.0)


def _elu(x):
    # alpha = 1; clamp the exp argument so the unselected branch never produces inf.
    return jnp.where(x > 0, x, jnp.exp(jnp.minimum(x, 0.0)) - 1.0)


def _pad2(w, rows, cols, dtype):
    r, c = w.shape
    return jnp.zeros((rows, cols), dtype).at[:r, :c].set(w.astype(dtype))


# ----------------------------------------------------------------------------- kernel
def tft_decoder_kernel(
    enc_ref,        # (Bp, S, Dp)   f32   -- whole sequence, one block
    h0_ref,         # (Bp, Dp)      f32
    c0_ref,         # (Bp, Dp)      f32
    w_ih_ref,       # (Dp, 4*Dp)    bf16  -- gate-blocked cols, 1/S pre-folded
    w_hh_ref,       # (Dp, 4*Dp)    bf16  -- gate-blocked cols
    b_lstm_ref,     # (1, 4*Dp)     f32   -- b_ih + b_hh, gate-blocked
    fc1_w_ref,      # (Dp, Dp)      bf16
    fc1_b_ref,      # (1, Dp)       f32
    fc2_w_ref,      # (Dp, Dp)      bf16
    fc2_b_ref,      # (1, Dp)       f32
    gate_w_ref,     # (Dp, Dp)      bf16
    gate_b_ref,     # (1, Dp)       f32
    out_w_ref,      # (Dp, Op)      bf16
    out_b_ref,      # (1, Op)       f32
    logits_ref,     # (Bp, Op)      f32   -- lane-dense output
    *, d_pad,
):
    Dp = d_pad

    # ---- context: f32 sum over the sequence (1/S is folded into w_ih at prep time) ----
    ctx_sum = jnp.sum(enc_ref[...].astype(jnp.float32), axis=1)          # (Bp, Dp)

    # ---- single LSTM step: two K=Dp MXU pushes summed in f32 (no lane concat) ----
    gates = (
        jnp.dot(ctx_sum.astype(jnp.bfloat16), w_ih_ref[...],
                preferred_element_type=jnp.float32)
        + jnp.dot(h0_ref[...].astype(jnp.bfloat16), w_hh_ref[...],
                  preferred_element_type=jnp.float32)
        + b_lstm_ref[...]
    )                                                                    # (Bp, 4*Dp)
    i_g = _sigmoid(gates[:, 0 * Dp:1 * Dp])
    f_g = _sigmoid(gates[:, 1 * Dp:2 * Dp])
    g_g = jnp.tanh(gates[:, 2 * Dp:3 * Dp])
    o_g = _sigmoid(gates[:, 3 * Dp:4 * Dp])
    c_new = f_g * c0_ref[...] + i_g * g_g
    dec_out = o_g * jnp.tanh(c_new)                                      # (Bp, Dp) f32

    # ---- GatedResidualNetwork (input == output size -> skip = dec_out) ----
    hidden = (
        jnp.dot(dec_out.astype(jnp.bfloat16), fc1_w_ref[...],
                preferred_element_type=jnp.float32)
        + fc1_b_ref[...]
    )
    hidden = _elu(hidden)
    # dropout: identity (eval mode)
    hidden = (
        jnp.dot(hidden.astype(jnp.bfloat16), fc2_w_ref[...],
                preferred_element_type=jnp.float32)
        + fc2_b_ref[...]
    )
    gate = _sigmoid(
        jnp.dot(hidden.astype(jnp.bfloat16), gate_w_ref[...],
                preferred_element_type=jnp.float32)
        + gate_b_ref[...]
    )
    ff_out = hidden * gate + (1.0 - gate) * dec_out                      # (Bp, Dp) f32

    # ---- output projection (lane-dense Op) ----
    logits = (
        jnp.dot(ff_out.astype(jnp.bfloat16), out_w_ref[...],
                preferred_element_type=jnp.float32)
        + out_b_ref[...]
    )
    logits_ref[...] = logits.astype(logits_ref.dtype)


# -------------------------------------------------------------- one-time parameter prep
def prepare_tft_decoder_params(params, *, d_model, output_size, seq_len):
    """Parameter-load-time layout prep (hoisted out of the per-call path):
    pad to lane/sublane-aligned sizes, lay LSTM gate columns out in Dp-sized blocks,
    fold 1/seq_len into w_ih, combine b_ih + b_hh, cast matmul weights to bf16.
    Weight layouts are the x@W convention (i.e. transposes of PyTorch state_dict)."""
    D, O, S = d_model, output_size, seq_len
    Dp = _round_up(D, 128)
    Op = _round_up(O, 128)

    def gate_block_pad(w, rows, rows_pad, dtype):
        out = jnp.zeros((rows_pad, 4 * Dp), jnp.float32)
        for g in range(4):  # PyTorch gate order: i, f, g, o
            out = out.at[:rows, g * Dp:g * Dp + D].set(w[:, g * D:(g + 1) * D])
        return out.astype(dtype)

    return {
        "w_ih":   gate_block_pad(params["w_ih"] * (1.0 / S), D, Dp, jnp.bfloat16),
        "w_hh":   gate_block_pad(params["w_hh"], D, Dp, jnp.bfloat16),
        "b_lstm": gate_block_pad(params["b_ih"] + params["b_hh"], 1, 1, jnp.float32),
        "fc1_w":  _pad2(params["fc1_w"], Dp, Dp, jnp.bfloat16),
        "fc1_b":  _pad2(params["fc1_b"], 1, Dp, jnp.float32),
        "fc2_w":  _pad2(params["fc2_w"], Dp, Dp, jnp.bfloat16),
        "fc2_b":  _pad2(params["fc2_b"], 1, Dp, jnp.float32),
        "gate_w": _pad2(params["gate_w"], Dp, Dp, jnp.bfloat16),
        "gate_b": _pad2(params["gate_b"], 1, Dp, jnp.float32),
        "out_w":  _pad2(params["out_w"], Dp, Op, jnp.bfloat16),
        "out_b":  _pad2(params["out_b"], 1, Op, jnp.float32),
    }


# ------------------------------------------------------------------------- apply wrapper
def tft_decoder_apply(enc_out, h_enc, c_enc, *, prepared, out_size):
    """enc_out: (B, S, D) f32; h_enc/c_enc: (L_enc, B, D) encoder hidden state.
    `prepared` must come from prepare_tft_decoder_params with the same seq_len."""
    B, S, D = enc_out.shape
    Dp = prepared["fc1_w"].shape[0]
    Op = prepared["out_w"].shape[1]
    Bp = _round_up(B, 8)

    h0 = h_enc[-1].astype(jnp.float32)   # matches encoder_hidden[0][-1].unsqueeze(0)
    c0 = c_enc[-1].astype(jnp.float32)

    # Skip the pad/copy entirely when the input is already (8,128)-aligned.
    if B == Bp and D == Dp:
        enc_p, h0_p, c0_p = enc_out, h0, c0
    else:
        enc_p = jnp.zeros((Bp, S, Dp), enc_out.dtype).at[:B, :, :D].set(enc_out)
        h0_p = jnp.zeros((Bp, Dp), jnp.float32).at[:B, :D].set(h0)
        c0_p = jnp.zeros((Bp, Dp), jnp.float32).at[:B, :D].set(c0)

    const2 = lambda i: (0, 0)
    const3 = lambda i: (0, 0, 0)
    in_specs = [
        pl.BlockSpec((Bp, S, Dp), const3),                          # enc_out (one block)
        pl.BlockSpec((Bp, Dp), const2),                             # h0
        pl.BlockSpec((Bp, Dp), const2),                             # c0
        pl.BlockSpec((Dp, 4 * Dp), const2),                         # w_ih (1/S folded)
        pl.BlockSpec((Dp, 4 * Dp), const2),                         # w_hh
        pl.BlockSpec((1, 4 * Dp), const2),                          # b_ih + b_hh
        pl.BlockSpec((Dp, Dp), const2), pl.BlockSpec((1, Dp), const2),   # fc1
        pl.BlockSpec((Dp, Dp), const2), pl.BlockSpec((1, Dp), const2),   # fc2
        pl.BlockSpec((Dp, Dp), const2), pl.BlockSpec((1, Dp), const2),   # gate
        pl.BlockSpec((Dp, Op), const2), pl.BlockSpec((1, Op), const2),   # out proj
    ]
    out_spec = pl.BlockSpec((Bp, Op), const2)

    # Actual footprint (double-buffer everything) + slack; stays tiny at D=128 and
    # leaves headroom on v7x's 64 MiB VMEM.
    enc_bytes = Bp * S * Dp * enc_p.dtype.itemsize
    weight_bytes = 2 * (2 * Dp * 4 * Dp + 3 * Dp * Dp + Dp * Op)    # bf16 weights
    vmem_limit = int(2 * (enc_bytes + weight_bytes)) + (4 << 20)

    kernel = functools.partial(tft_decoder_kernel, d_pad=Dp)

    logits_p = pl.pallas_call(
        kernel,
        out_shape=jax.ShapeDtypeStruct((Bp, Op), jnp.float32),
        grid_spec=pltpu.PrefetchScalarGridSpec(
            num_scalar_prefetch=0,
            grid=(1,),
            in_specs=in_specs,
            out_specs=out_spec,
        ),
        compiler_params=pltpu.CompilerParams(
            dimension_semantics=("arbitrary",),
            vmem_limit_bytes=vmem_limit,
        ),
    )(enc_p, h0_p, c0_p,
      prepared["w_ih"], prepared["w_hh"], prepared["b_lstm"],
      prepared["fc1_w"], prepared["fc1_b"], prepared["fc2_w"], prepared["fc2_b"],
      prepared["gate_w"], prepared["gate_b"], prepared["out_w"], prepared["out_b"])

    return logits_p[:B, :out_size]


# ----------------------------------------------------------------------------- references
def _reference_matched(enc_out, h_enc, c_enc, p):
    """Plain-JAX reference mirroring the PyTorch forward (eval mode) with the same
    bf16 matmul-input casts / 1/S fold the kernel performs (f32 accum & elementwise)."""
    B, S, D = enc_out.shape
    bf = lambda x: x.astype(jnp.bfloat16)
    f32 = jnp.float32
    h0, c0 = h_enc[-1], c_enc[-1]

    ctx_sum = jnp.sum(enc_out.astype(f32), axis=1)
    gates = (jnp.dot(bf(ctx_sum), bf(p["w_ih"] * (1.0 / S)), preferred_element_type=f32)
             + jnp.dot(bf(h0), bf(p["w_hh"]), preferred_element_type=f32)
             + (p["b_ih"] + p["b_hh"]))
    i_g = _sigmoid(gates[:, 0 * D:1 * D])
    f_g = _sigmoid(gates[:, 1 * D:2 * D])
    g_g = jnp.tanh(gates[:, 2 * D:3 * D])
    o_g = _sigmoid(gates[:, 3 * D:4 * D])
    c_new = f_g * c0 + i_g * g_g
    dec = o_g * jnp.tanh(c_new)

    hid = _elu(jnp.dot(bf(dec), bf(p["fc1_w"]), preferred_element_type=f32) + p["fc1_b"])
    hid = jnp.dot(bf(hid), bf(p["fc2_w"]), preferred_element_type=f32) + p["fc2_b"]
    gate = _sigmoid(jnp.dot(bf(hid), bf(p["gate_w"]), preferred_element_type=f32) + p["gate_b"])
    ff = hid * gate + (1.0 - gate) * dec
    return jnp.dot(bf(ff), bf(p["out_w"]), preferred_element_type=f32) + p["out_b"]


def _reference_f32(enc_out, h_enc, c_enc, p):
    """Pure f32 reference (exactly the PyTorch math, eval mode)."""
    D = enc_out.shape[-1]
    h0, c0 = h_enc[-1], c_enc[-1]
    ctx = jnp.mean(enc_out, axis=1)
    gates = ctx @ p["w_ih"] + h0 @ p["w_hh"] + p["b_ih"] + p["b_hh"]
    i_g = jax.nn.sigmoid(gates[:, 0 * D:1 * D])
    f_g = jax.nn.sigmoid(gates[:, 1 * D:2 * D])
    g_g = jnp.tanh(gates[:, 2 * D:3 * D])
    o_g = jax.nn.sigmoid(gates[:, 3 * D:4 * D])
    c_new = f_g * c0 + i_g * g_g
    dec = o_g * jnp.tanh(c_new)
    hid = jax.nn.elu(dec @ p["fc1_w"] + p["fc1_b"])
    hid = hid @ p["fc2_w"] + p["fc2_b"]
    gate = jax.nn.sigmoid(hid @ p["gate_w"] + p["gate_b"])
    ff = hid * gate + (1.0 - gate) * dec
    return ff @ p["out_w"] + p["out_b"]


def make_params(key, d_model, output_size):
    ks = jax.random.split(key, 12)
    s = 0.1
    D, O = d_model, output_size
    # Layouts follow the x @ W convention (transposes of the PyTorch state_dict tensors).
    return {
        "w_ih":   s * jax.random.normal(ks[0], (D, 4 * D), jnp.float32),
        "w_hh":   s * jax.random.normal(ks[1], (D, 4 * D), jnp.float32),
        "b_ih":   s * jax.random.normal(ks[2], (1, 4 * D), jnp.float32),
        "b_hh":   s * jax.random.normal(ks[3], (1, 4 * D), jnp.float32),
        "fc1_w":  s * jax.random.normal(ks[4], (D, D), jnp.float32),
        "fc1_b":  s * jax.random.normal(ks[5], (1, D), jnp.float32),
        "fc2_w":  s * jax.random.normal(ks[6], (D, D), jnp.float32),
        "fc2_b":  s * jax.random.normal(ks[7], (1, D), jnp.float32),
        "gate_w": s * jax.random.normal(ks[8], (D, D), jnp.float32),
        "gate_b": s * jax.random.normal(ks[9], (1, D), jnp.float32),
        "out_w":  s * jax.random.normal(ks[10], (D, O), jnp.float32),
        "out_b":  s * jax.random.normal(ks[11], (1, O), jnp.float32),
    }


if __name__ == "__main__":
    # d_model=128 / output_size=200 are the module defaults; B=8 fills the sublanes.
    B, S, D, O = 8, 32, 128, 200
    key = jax.random.PRNGKey(0)
    k_enc, k_h, k_c, k_p = jax.random.split(key, 4)

    enc_out = jax.random.normal(k_enc, (B, S, D), jnp.float32)
    h_enc = jax.random.normal(k_h, (1, B, D), jnp.float32)   # encoder hidden (num_layers=1)
    c_enc = jax.random.normal(k_c, (1, B, D), jnp.float32)
    params = make_params(k_p, D, O)

    # One-time (parameter-load-time) prep, hoisted out of the per-call path.
    prepared = prepare_tft_decoder_params(params, d_model=D, output_size=O, seq_len=S)
    run = jax.jit(functools.partial(tft_decoder_apply, prepared=prepared, out_size=O))

    logits = run(enc_out, h_enc, c_enc)
    jax.block_until_ready(logits)
    assert logits.shape == (B, O)

    ref_m = _reference_matched(enc_out, h_enc, c_enc, params)
    assert jnp.allclose(logits, ref_m, atol=1e-3, rtol=1e-3), "mismatch vs matched reference"

    ref_f = _reference_f32(enc_out, h_enc, c_enc, params)
    assert jnp.allclose(logits, ref_f, atol=5e-2, rtol=5e-2), "mismatch vs f32 reference"

    print("KERNEL_OK")
</pallas_src>

<mosaic_0001>
module attributes {stable_mosaic.version = 11 : i64} {
  func.func @tft_decoder_kernel(%arg0: i32, %arg1: memref<8x32x128xf32, #tpu.memory_space<vmem>>, %arg2: memref<8x128xf32, #tpu.memory_space<vmem>>, %arg3: memref<8x128xf32, #tpu.memory_space<vmem>>, %arg4: memref<128x512xbf16, #tpu.memory_space<vmem>>, %arg5: memref<128x512xbf16, #tpu.memory_space<vmem>>, %arg6: memref<1x512xf32, #tpu.memory_space<vmem>>, %arg7: memref<128x128xbf16, #tpu.memory_space<vmem>>, %arg8: memref<1x128xf32, #tpu.memory_space<vmem>>, %arg9: memref<128x128xbf16, #tpu.memory_space<vmem>>, %arg10: memref<1x128xf32, #tpu.memory_space<vmem>>, %arg11: memref<128x128xbf16, #tpu.memory_space<vmem>>, %arg12: memref<1x128xf32, #tpu.memory_space<vmem>>, %arg13: memref<128x256xbf16, #tpu.memory_space<vmem>>, %arg14: memref<1x256xf32, #tpu.memory_space<vmem>>, %arg15: memref<8x256xf32, #tpu.memory_space<vmem>>) attributes {dimension_semantics = [#tpu.dimension_semantics<arbitrary>], iteration_bounds = array<i64: 1>, scalar_prefetch = 0 : i64, scratch_operands = 0 : i64, tpu.core_type = #tpu.core_type<tc>, window_params = [{pipeline_mode = #tpu.pipeline_mode<synchronous>, transform_indices = @transform_0, window_bounds = array<i64: 8, 32, 128>}, {pipeline_mode = #tpu.pipeline_mode<synchronous>, transform_indices = @transform_1, window_bounds = array<i64: 8, 128>}, {pipeline_mode = #tpu.pipeline_mode<synchronous>, transform_indices = @transform_2, window_bounds = array<i64: 8, 128>}, {pipeline_mode = #tpu.pipeline_mode<synchronous>, transform_indices = @transform_3, window_bounds = array<i64: 128, 512>}, {pipeline_mode = #tpu.pipeline_mode<synchronous>, transform_indices = @transform_4, window_bounds = array<i64: 128, 512>}, {pipeline_mode = #tpu.pipeline_mode<synchronous>, transform_indices = @transform_5, window_bounds = array<i64: 1, 512>}, {pipeline_mode = #tpu.pipeline_mode<synchronous>, transform_indices = @transform_6, window_bounds = array<i64: 128, 128>}, {pipeline_mode = #tpu.pipeline_mode<synchronous>, transform_indices = @transform_7, window_bounds = array<i64: 1, 128>}, {pipeline_mode = #tpu.pipeline_mode<synchronous>, transform_indices = @transform_8, window_bounds = array<i64: 128, 128>}, {pipeline_mode = #tpu.pipeline_mode<synchronous>, transform_indices = @transform_9, window_bounds = array<i64: 1, 128>}, {pipeline_mode = #tpu.pipeline_mode<synchronous>, transform_indices = @transform_10, window_bounds = array<i64: 128, 128>}, {pipeline_mode = #tpu.pipeline_mode<synchronous>, transform_indices = @transform_11, window_bounds = array<i64: 1, 128>}, {pipeline_mode = #tpu.pipeline_mode<synchronous>, transform_indices = @transform_12, window_bounds = array<i64: 128, 256>}, {pipeline_mode = #tpu.pipeline_mode<synchronous>, transform_indices = @transform_13, window_bounds = array<i64: 1, 256>}, {pipeline_mode = #tpu.pipeline_mode<synchronous>, transform_indices = @transform_14, window_bounds = array<i64: 8, 256>}]} {
    %c0 = arith.constant 0 : index
    %c0_0 = arith.constant 0 : index
    %c0_1 = arith.constant 0 : index
    %0 = vector.load %arg1[%c0, %c0_0, %c0_1] : memref<8x32x128xf32, #tpu.memory_space<vmem>>, vector<8x32x128xf32>
    %cst = arith.constant dense<0.000000e+00> : vector<8x128xf32>
    %1 = vector.multi_reduction <add>, %0, %cst [1] : vector<8x32x128xf32> to vector<8x128xf32>
    %2 = arith.truncf %1 : vector<8x128xf32> to vector<8x128xbf16>
    %c0_2 = arith.constant 0 : index
    %c0_3 = arith.constant 0 : index
    %3 = vector.load %arg4[%c0_2, %c0_3] : memref<128x512xbf16, #tpu.memory_space<vmem>>, vector<128x512xbf16>
    %cst_4 = arith.constant dense<0.000000e+00> : vector<8x512xf32>
    %4 = tpu.matmul %2, %3, %cst_4 {dimension_numbers = #tpu.dot_dimension_numbers<[1], [0], [0], [1], [0, 0, 1, 1], [], []>} : vector<8x128xbf16>, vector<128x512xbf16>, vector<8x512xf32> -> vector<8x512xf32>
    %c0_5 = arith.constant 0 : index
    %c0_6 = arith.constant 0 : index
    %5 = vector.load %arg2[%c0_5, %c0_6] : memref<8x128xf32, #tpu.memory_space<vmem>>, vector<8x128xf32>
    %6 = arith.truncf %5 : vector<8x128xf32> to vector<8x128xbf16>
    %c0_7 = arith.constant 0 : index
    %c0_8 = arith.constant 0 : index
    %7 = vector.load %arg5[%c0_7, %c0_8] : memref<128x512xbf16, #tpu.memory_space<vmem>>, vector<128x512xbf16>
    %cst_9 = arith.constant dense<0.000000e+00> : vector<8x512xf32>
    %8 = tpu.matmul %6, %7, %cst_9 {dimension_numbers = #tpu.dot_dimension_numbers<[1], [0], [0], [1], [0, 0, 1, 1], [], []>} : vector<8x128xbf16>, vector<128x512xbf16>, vector<8x512xf32> -> vector<8x512xf32>
    %9 = arith.addf %4, %8 : vector<8x512xf32>
    %c0_10 = arith.constant 0 : index
    %c0_11 = arith.constant 0 : index
    %10 = vector.load %arg6[%c0_10, %c0_11] : memref<1x512xf32, #tpu.memory_space<vmem>>, vector<1x512xf32>
    %11 = vector.broadcast %10 : vector<1x512xf32> to vector<8x512xf32>
    %12 = arith.addf %9, %11 : vector<8x512xf32>
    %13 = vector.extract_strided_slice %12 {offsets = [0, 0], sizes = [8, 128], strides = [1, 1]} : vector<8x512xf32> to vector<8x128xf32>
    %cst_12 = arith.constant 5.000000e-01 : f32
    %14 = vector.broadcast %cst_12 : f32 to vector<8x128xf32>
    %15 = arith.mulf %14, %13 : vector<8x128xf32>
    %16 = math.tanh %15 : vector<8x128xf32>
    %cst_13 = arith.constant 1.000000e+00 : f32
    %17 = vector.broadcast %cst_13 : f32 to vector<8x128xf32>
    %18 = arith.addf %16, %17 : vector<8x128xf32>
    %cst_14 = arith.constant 5.000000e-01 : f32
    %19 = vector.broadcast %cst_14 : f32 to vector<8x128xf32>
    %20 = arith.mulf %19, %18 : vector<8x128xf32>
    %21 = vector.extract_strided_slice %12 {offsets = [0, 128], sizes = [8, 128], strides = [1, 1]} : vector<8x512xf32> to vector<8x128xf32>
    %cst_15 = arith.constant 5.000000e-01 : f32
    %22 = vector.broadcast %cst_15 : f32 to vector<8x128xf32>
    %23 = arith.mulf %22, %21 : vector<8x128xf32>
    %24 = math.tanh %23 : vector<8x128xf32>
    %cst_16 = arith.constant 1.000000e+00 : f32
    %25 = vector.broadcast %cst_16 : f32 to vector<8x128xf32>
    %26 = arith.addf %24, %25 : vector<8x128xf32>
    %cst_17 = arith.constant 5.000000e-01 : f32
    %27 = vector.broadcast %cst_17 : f32 to vector<8x128xf32>
    %28 = arith.mulf %27, %26 : vector<8x128xf32>
    %29 = vector.extract_strided_slice %12 {offsets = [0, 256], sizes = [8, 128], strides = [1, 1]} : vector<8x512xf32> to vector<8x128xf32>
    %30 = math.tanh %29 : vector<8x128xf32>
    %31 = vector.extract_strided_slice %12 {offsets = [0, 384], sizes = [8, 128], strides = [1, 1]} : vector<8x512xf32> to vector<8x128xf32>
    %cst_18 = arith.constant 5.000000e-01 : f32
    %32 = vector.broadcast %cst_18 : f32 to vector<8x128xf32>
    %33 = arith.mulf %32, %31 : vector<8x128xf32>
    %34 = math.tanh %33 : vector<8x128xf32>
    %cst_19 = arith.constant 1.000000e+00 : f32
    %35 = vector.broadcast %cst_19 : f32 to vector<8x128xf32>
    %36 = arith.addf %34, %35 : vector<8x128xf32>
    %cst_20 = arith.constant 5.000000e-01 : f32
    %37 = vector.broadcast %cst_20 : f32 to vector<8x128xf32>
    %38 = arith.mulf %37, %36 : vector<8x128xf32>
    %c0_21 = arith.constant 0 : index
    %c0_22 = arith.constant 0 : index
    %39 = vector.load %arg3[%c0_21, %c0_22] : memref<8x128xf32, #tpu.memory_space<vmem>>, vector<8x128xf32>
    %40 = arith.mulf %28, %39 : vector<8x128xf32>
    %41 = arith.mulf %20, %30 : vector<8x128xf32>
    %42 = arith.addf %40, %41 : vector<8x128xf32>
    %43 = math.tanh %42 : vector<8x128xf32>
    %44 = arith.mulf %38, %43 : vector<8x128xf32>
    %45 = arith.truncf %44 : vector<8x128xf32> to vector<8x128xbf16>
    %c0_23 = arith.constant 0 : index
    %c0_24 = arith.constant 0 : index
    %46 = vector.load %arg7[%c0_23, %c0_24] : memref<128x128xbf16, #tpu.memory_space<vmem>>, vector<128x128xbf16>
    %cst_25 = arith.constant dense<0.000000e+00> : vector<8x128xf32>
    %47 = tpu.matmul %45, %46, %cst_25 {dimension_numbers = #tpu.dot_dimension_numbers<[1], [0], [0], [1], [0, 0, 1, 1], [], []>} : vector<8x128xbf16>, vector<128x128xbf16>, vector<8x128xf32> -> vector<8x128xf32>
    %c0_26 = arith.constant 0 : index
    %c0_27 = arith.constant 0 : index
    %48 = vector.load %arg8[%c0_26, %c0_27] : memref<1x128xf32, #tpu.memory_space<vmem>>, vector<1x128xf32>
    %49 = vector.broadcast %48 : vector<1x128xf32> to vector<8x128xf32>
    %50 = arith.addf %47, %49 : vector<8x128xf32>
    %cst_28 = arith.constant 0.000000e+00 : f32
    %51 = vector.broadcast %cst_28 : f32 to vector<8x128xf32>
    %52 = arith.cmpf ogt, %50, %51 : vector<8x128xf32>
    %cst_29 = arith.constant 0.000000e+00 : f32
    %53 = vector.broadcast %cst_29 : f32 to vector<8x128xf32>
    %54 = arith.minimumf %50, %53 : vector<8x128xf32>
    %55 = math.exp %54 : vector<8x128xf32>
    %cst_30 = arith.constant 1.000000e+00 : f32
    %56 = vector.broadcast %cst_30 : f32 to vector<8x128xf32>
    %57 = arith.subf %55, %56 : vector<8x128xf32>
    %58 = arith.select %52, %50, %57 : vector<8x128xi1>, vector<8x128xf32>
    %59 = arith.truncf %58 : vector<8x128xf32> to vector<8x128xbf16>
    %c0_31 = arith.constant 0 : index
    %c0_32 = arith.constant 0 : index
    %60 = vector.load %arg9[%c0_31, %c0_32] : memref<128x128xbf16, #tpu.memory_space<vmem>>, vector<128x128xbf16>
    %cst_33 = arith.constant dense<0.000000e+00> : vector<8x128xf32>
    %61 = tpu.matmul %59, %60, %cst_33 {dimension_numbers = #tpu.dot_dimension_numbers<[1], [0], [0], [1], [0, 0, 1, 1], [], []>} : vector<8x128xbf16>, vector<128x128xbf16>, vector<8x128xf32> -> vector<8x128xf32>
    %c0_34 = arith.constant 0 : index
    %c0_35 = arith.constant 0 : index
    %62 = vector.load %arg10[%c0_34, %c0_35] : memref<1x128xf32, #tpu.memory_space<vmem>>, vector<1x128xf32>
    %63 = vector.broadcast %62 : vector<1x128xf32> to vector<8x128xf32>
    %64 = arith.addf %61, %63 : vector<8x128xf32>
    %65 = arith.truncf %64 : vector<8x128xf32> to vector<8x128xbf16>
    %c0_36 = arith.constant 0 : index
    %c0_37 = arith.constant 0 : index
    %66 = vector.load %arg11[%c0_36, %c0_37] : memref<128x128xbf16, #tpu.memory_space<vmem>>, vector<128x128xbf16>
    %cst_38 = arith.constant dense<0.000000e+00> : vector<8x128xf32>
    %67 = tpu.matmul %65, %66, %cst_38 {dimension_numbers = #tpu.dot_dimension_numbers<[1], [0], [0], [1], [0, 0, 1, 1], [], []>} : vector<8x128xbf16>, vector<128x128xbf16>, vector<8x128xf32> -> vector<8x128xf32>
    %c0_39 = arith.constant 0 : index
    %c0_40 = arith.constant 0 : index
    %68 = vector.load %arg12[%c0_39, %c0_40] : memref<1x128xf32, #tpu.memory_space<vmem>>, vector<1x128xf32>
    %69 = vector.broadcast %68 : vector<1x128xf32> to vector<8x128xf32>
    %70 = arith.addf %67, %69 : vector<8x128xf32>
    %cst_41 = arith.constant 5.000000e-01 : f32
    %71 = vector.broadcast %cst_41 : f32 to vector<8x128xf32>
    %72 = arith.mulf %71, %70 : vector<8x128xf32>
    %73 = math.tanh %72 : vector<8x128xf32>
    %cst_42 = arith.constant 1.000000e+00 : f32
    %74 = vector.broadcast %cst_42 : f32 to vector<8x128xf32>
    %75 = arith.addf %73, %74 : vector<8x128xf32>
    %cst_43 = arith.constant 5.000000e-01 : f32
    %76 = vector.broadcast %cst_43 : f32 to vector<8x128xf32>
    %77 = arith.mulf %76, %75 : vector<8x128xf32>
    %78 = arith.mulf %64, %77 : vector<8x128xf32>
    %cst_44 = arith.constant 1.000000e+00 : f32
    %79 = vector.broadcast %cst_44 : f32 to vector<8x128xf32>
    %80 = arith.subf %79, %77 : vector<8x128xf32>
    %81 = arith.mulf %80, %44 : vector<8x128xf32>
    %82 = arith.addf %78, %81 : vector<8x128xf32>
    %83 = arith.truncf %82 : vector<8x128xf32> to vector<8x128xbf16>
    %c0_45 = arith.constant 0 : index
    %c0_46 = arith.constant 0 : index
    %84 = vector.load %arg13[%c0_45, %c0_46] : memref<128x256xbf16, #tpu.memory_space<vmem>>, vector<128x256xbf16>
    %cst_47 = arith.constant dense<0.000000e+00> : vector<8x256xf32>
    %85 = tpu.matmul %83, %84, %cst_47 {dimension_numbers = #tpu.dot_dimension_numbers<[1], [0], [0], [1], [0, 0, 1, 1], [], []>} : vector<8x128xbf16>, vector<128x256xbf16>, vector<8x256xf32> -> vector<8x256xf32>
    %c0_48 = arith.constant 0 : index
    %c0_49 = arith.constant 0 : index
    %86 = vector.load %arg14[%c0_48, %c0_49] : memref<1x256xf32, #tpu.memory_space<vmem>>, vector<1x256xf32>
    %87 = vector.broadcast %86 : vector<1x256xf32> to vector<8x256xf32>
    %88 = arith.addf %85, %87 : vector<8x256xf32>
    %c0_50 = arith.constant 0 : index
    %c0_51 = arith.constant 0 : index
    %89 = vector.load %arg15[%c0_50, %c0_51] : memref<8x256xf32, #tpu.memory_space<vmem>>, vector<8x256xf32>
    tpu.vector_store %arg15[%c0_50, %c0_51], %88 {strides = array<i32>} : memref<8x256xf32, #tpu.memory_space<vmem>>, vector<8x256xf32>,
    return
  }
  func.func @transform_0(%arg0: i32) -> (i32, i32, i32) {
    %c0_i32 = arith.constant 0 : i32
    %c0_i32_0 = arith.constant 0 : i32
    %c0_i32_1 = arith.constant 0 : i32
    %c0_i32_2 = arith.constant 0 : i32
    return %c0_i32, %c0_i32_0, %c0_i32_1 : i32, i32, i32
  }
  func.func @transform_1(%arg0: i32) -> (i32, i32) {
    %c0_i32 = arith.constant 0 : i32
    %c0_i32_0 = arith.constant 0 : i32
    %c0_i32_1 = arith.constant 0 : i32
    return %c0_i32, %c0_i32_0 : i32, i32
  }
  func.func @transform_2(%arg0: i32) -> (i32, i32) {
    %c0_i32 = arith.constant 0 : i32
    %c0_i32_0 = arith.constant 0 : i32
    %c0_i32_1 = arith.constant 0 : i32
    return %c0_i32, %c0_i32_0 : i32, i32
  }
  func.func @transform_3(%arg0: i32) -> (i32, i32) {
    %c0_i32 = arith.constant 0 : i32
    %c0_i32_0 = arith.constant 0 : i32
    %c0_i32_1 = arith.constant 0 : i32
    return %c0_i32, %c0_i32_0 : i32, i32
  }
  func.func @transform_4(%arg0: i32) -> (i32, i32) {
    %c0_i32 = arith.constant 0 : i32
    %c0_i32_0 = arith.constant 0 : i32
    %c0_i32_1 = arith.constant 0 : i32
    return %c0_i32, %c0_i32_0 : i32, i32
  }
  func.func @transform_5(%arg0: i32) -> (i32, i32) {
    %c0_i32 = arith.constant 0 : i32
    %c0_i32_0 = arith.constant 0 : i32
    %c0_i32_1 = arith.constant 0 : i32
    return %c0_i32, %c0_i32_0 : i32, i32
  }
  func.func @transform_6(%arg0: i32) -> (i32, i32) {
    %c0_i32 = arith.constant 0 : i32
    %c0_i32_0 = arith.constant 0 : i32
    %c0_i32_1 = arith.constant 0 : i32
    return %c0_i32, %c0_i32_0 : i32, i32
  }
  func.func @transform_7(%arg0: i32) -> (i32, i32) {
    %c0_i32 = arith.constant 0 : i32
    %c0_i32_0 = arith.constant 0 : i32
    %c0_i32_1 = arith.constant 0 : i32
    return %c0_i32, %c0_i32_0 : i32, i32
  }
  func.func @transform_8(%arg0: i32) -> (i32, i32) {
    %c0_i32 = arith.constant 0 : i32
    %c0_i32_0 = arith.constant 0 : i32
    %c0_i32_1 = arith.constant 0 : i32
    return %c0_i32, %c0_i32_0 : i32, i32
  }
  func.func @transform_9(%arg0: i32) -> (i32, i32) {
    %c0_i32 = arith.constant 0 : i32
    %c0_i32_0 = arith.constant 0 : i32
    %c0_i32_1 = arith.constant 0 : i32
    return %c0_i32, %c0_i32_0 : i32, i32
  }
  func.func @transform_10(%arg0: i32) -> (i32, i32) {
    %c0_i32 = arith.constant 0 : i32
    %c0_i32_0 = arith.constant 0 : i32
    %c0_i32_1 = arith.constant 0 : i32
    return %c0_i32, %c0_i32_0 : i32, i32
  }
  func.func @transform_11(%arg0: i32) -> (i32, i32) {
    %c0_i32 = arith.constant 0 : i32
    %c0_i32_0 = arith.constant 0 : i32
    %c0_i32_1 = arith.constant 0 : i32
    return %c0_i32, %c0_i32_0 : i32, i32
  }
  func.func @transform_12(%arg0: i32) -> (i32, i32) {
    %c0_i32 = arith.constant 0 : i32
    %c0_i32_0 = arith.constant 0 : i32
    %c0_i32_1 = arith.constant 0 : i32
    return %c0_i32, %c0_i32_0 : i32, i32
  }
  func.func @transform_13(%arg0: i32) -> (i32, i32) {
    %c0_i32 = arith.constant 0 : i32
    %c0_i32_0 = arith.constant 0 : i32
    %c0_i32_1 = arith.constant 0 : i32
    return %c0_i32, %c0_i32_0 : i32, i32
  }
  func.func @transform_14(%arg0: i32) -> (i32, i32) {
    %c0_i32 = arith.constant 0 : i32
    %c0_i32_0 = arith.constant 0 : i32
    %c0_i32_1 = arith.constant 0 : i32
    return %c0_i32, %c0_i32_0 : i32, i32
  }
}

</mosaic_0001>

<llo_original>
// kernel: tft_decoder_apply.1
$region0: #{tft_decoder_apply.1}
  #allocation0 [shape = 'u32[]', space=smem, size = 0x4, offset = 0x4, fixed_abs, tag = 'smem constant byte address 0x4 - core index']
  #allocation1 [shape = 'u32[144,128]{1,0:T(1,128)}', space=vmem, size = 0x12000, scoped, tag = 'internal scratch']
  %s0 = inlined_call_operand.hbm [shape: f32[8,32,128], index: 0, kind: input, shape index: {}]
  %s1 = inlined_call_operand.hbm [shape: f32[8,128], index: 1, kind: input, shape index: {}]
  %s2 = inlined_call_operand.hbm [shape: f32[8,128], index: 2, kind: input, shape index: {}]
  %s3 = inlined_call_operand.hbm [shape: bf16[128,512], index: 3, kind: input, shape index: {}]
  %s4 = inlined_call_operand.hbm [shape: bf16[128,512], index: 4, kind: input, shape index: {}]
  %s5 = inlined_call_operand.vmem [shape: f32[1,512], index: 5, kind: input, shape index: {}]
  %s6 = inlined_call_operand.hbm [shape: bf16[128,128], index: 6, kind: input, shape index: {}]
  %s7 = inlined_call_operand.vmem [shape: f32[1,128], index: 7, kind: input, shape index: {}]
  %s8 = inlined_call_operand.hbm [shape: bf16[128,128], index: 8, kind: input, shape index: {}]
  %s9 = inlined_call_operand.vmem [shape: f32[1,128], index: 9, kind: input, shape index: {}]
  %s10 = inlined_call_operand.hbm [shape: bf16[128,128], index: 10, kind: input, shape index: {}]
  %s11 = inlined_call_operand.vmem [shape: f32[1,128], index: 11, kind: input, shape index: {}]
  %s12 = inlined_call_operand.hbm [shape: bf16[128,256], index: 12, kind: input, shape index: {}]
  %s13 = inlined_call_operand.vmem [shape: f32[1,256], index: 13, kind: input, shape index: {}]
  %s14 = inlined_call_operand.hbm [shape: f32[8,256], index: 14, kind: output, shape index: {}]
  %s15 = sld [smem:[#allocation0]]
  $region102: #{tft_decoder_apply.1} parent=0
    _
  %s17 = ssub.s32 1, %s15
  %s18 = scalar_select 0, %s17, %s15
  $region1: #{tft_decoder_apply.1} parent=0
    #allocation2 [shape = 'u8[131072]{0}', space=vmem, size = 0x20000, scoped, tag = 'input window, operand 0, single buffered']
    #allocation3 [shape = 's32[1]{0}', space=sflag, size = 0x4, scoped, tag = 'scoped memory for tft_decoder_apply.1']
    #allocation4 [shape = 's32[1]{0}', space=sflag, size = 0x4, scoped, tag = 'scoped memory for tft_decoder_apply.1']
    #allocation5 [shape = 'u8[4096]{0}', space=vmem, size = 0x1000, scoped, tag = 'input window, operand 1, single buffered']
    #allocation6 [shape = 's32[1]{0}', space=sflag, size = 0x4, scoped, tag = 'scoped memory for tft_decoder_apply.1']
    #allocation7 [shape = 'u8[4096]{0}', space=vmem, size = 0x1000, scoped, tag = 'input window, operand 2, single buffered']
    #allocation8 [shape = 'u8[131072]{0}', space=vmem, size = 0x20000, scoped, tag = 'input window, operand 3, single buffered']
    #allocation9 [shape = 's32[1]{0}', space=sflag, size = 0x4, scoped, tag = 'scoped memory for tft_decoder_apply.1']
    #allocation10 [shape = 'u8[131072]{0}', space=vmem, size = 0x20000, scoped, tag = 'input window, operand 4, single buffered']
    #allocation11 [shape = 'u8[32768]{0}', space=vmem, size = 0x8000, scoped, tag = 'input window, operand 6, single buffered']
    #allocation12 [shape = 's32[1]{0}', space=sflag, size = 0x4, scoped, tag = 'scoped memory for tft_decoder_apply.1']
    #allocation13 [shape = 'u8[32768]{0}', space=vmem, size = 0x8000, scoped, tag = 'input window, operand 8, single buffered']
    #allocation14 [shape = 'u8[32768]{0}', space=vmem, size = 0x8000, scoped, tag = 'input window, operand 10, single buffered']
    #allocation15 [shape = 's32[1]{0}', space=sflag, size = 0x4, scoped, tag = 'scoped memory for tft_decoder_apply.1']
    #allocation16 [shape = 'u8[65536]{0}', space=vmem, size = 0x10000, scoped, tag = 'input window, operand 12, single buffered']
    #allocation17 [shape = 'u8[8192]{0}', space=vmem, size = 0x2000, scoped, tag = 'output window, operand 0, single buffered']
    %19 = vsyncpa [#allocation3], 0
    %20 = vsyncpa [#allocation6], 0
    %21 = vsyncpa [#allocation9], 0
    %22 = vsyncpa [#allocation12], 0
    %23 = vsyncpa [#allocation15], 0
    %24 = vsyncpa [#allocation4], 0
    // Predicated region
    $region2: #{tft_decoder_apply.1} parent=1 // pred_check
      _
    $region3: #{tft_decoder_apply.1} parent=1 // pred_check_branch
      %26 = sbr.rel (0) target = $region5
    $region4: #{tft_decoder_apply.1} parent=1 // pred_region
      %s28 = ssub.s32 4096, 4096
      %29 = vsyncadd [#allocation3], %s28
      %s30 = sshll.u32 [#allocation2], 4
      %s31 = int_to_ptr.vmem [resolvable:$true] %s30
      %36 = dma.hbm_to_vmem [thread:$0]  %s0, 4096, %s31, [#allocation3], 128, 128, 8
    $region5: #{tft_decoder_apply.1} parent=1 // pred_fallthru
      _
    // Predicated region
    $region6: #{tft_decoder_apply.1} parent=1 // pred_check
      _
    $region7: #{tft_decoder_apply.1} parent=1 // pred_check_branch
      %38 = sbr.rel (0) target = $region9
    $region8: #{tft_decoder_apply.1} parent=1 // pred_region
      %s40 = ssub.s32 128, 128
      %41 = vsyncadd [#allocation6], %s40
      %s43 = sshll.u32 [#allocation5], 4
      %s44 = int_to_ptr.vmem [resolvable:$true] %s43
      %46 = dma.hbm_to_vmem [thread:$0]  %s1, 128, %s44, [#allocation6]
    $region9: #{tft_decoder_apply.1} parent=1 // pred_fallthru
      _
    // Predicated region
    $region10: #{tft_decoder_apply.1} parent=1 // pred_check
      _
    $region11: #{tft_decoder_apply.1} parent=1 // pred_check_branch
      %48 = sbr.rel (0) target = $region13
    $region12: #{tft_decoder_apply.1} parent=1 // pred_region
      %s50 = ssub.s32 128, 128
      %51 = vsyncadd [#allocation6], %s50
      %s53 = sshll.u32 [#allocation7], 4
      %s54 = int_to_ptr.vmem [resolvable:$true] %s53
      %56 = dma.hbm_to_vmem [thread:$0]  %s2, 128, %s54, [#allocation6]
    $region13: #{tft_decoder_apply.1} parent=1 // pred_fallthru
      _
    // Predicated region
    $region14: #{tft_decoder_apply.1} parent=1 // pred_check
      _
    $region15: #{tft_decoder_apply.1} parent=1 // pred_check_branch
      %58 = sbr.rel (0) target = $region17
    $region16: #{tft_decoder_apply.1} parent=1 // pred_region
      %s60 = ssub.s32 4096, 4096
      %61 = vsyncadd [#allocation9], %s60
      %s62 = sshll.u32 [#allocation8], 4
      %s63 = int_to_ptr.vmem [resolvable:$true] %s62
      %68 = dma.hbm_to_vmem [thread:$0]  %s3, 4096, %s63, [#allocation9], 256, 256, 16
    $region17: #{tft_decoder_apply.1} parent=1 // pred_fallthru
      _
    // Predicated region
    $region18: #{tft_decoder_apply.1} parent=1 // pred_check
      _
    $region19: #{tft_decoder_apply.1} parent=1 // pred_check_branch
      %70 = sbr.rel (0) target = $region21
    $region20: #{tft_decoder_apply.1} parent=1 // pred_region
      %s72 = ssub.s32 4096, 4096
      %73 = vsyncadd [#allocation9], %s72
      %s74 = sshll.u32 [#allocation10], 4
      %s75 = int_to_ptr.vmem [resolvable:$true] %s74
      %80 = dma.hbm_to_vmem [thread:$0]  %s4, 4096, %s75, [#allocation9], 256, 256, 16
    $region21: #{tft_decoder_apply.1} parent=1 // pred_fallthru
      _
    // Predicated region
    $region22: #{tft_decoder_apply.1} parent=1 // pred_check
      _
    $region23: #{tft_decoder_apply.1} parent=1 // pred_check_branch
      %82 = sbr.rel (0) target = $region25
    $region24: #{tft_decoder_apply.1} parent=1 // pred_region
      _
    $region25: #{tft_decoder_apply.1} parent=1 // pred_fallthru
      _
    // Predicated region
    $region26: #{tft_decoder_apply.1} parent=1 // pred_check
      _
    $region27: #{tft_decoder_apply.1} parent=1 // pred_check_branch
      %84 = sbr.rel (0) target = $region29
    $region28: #{tft_decoder_apply.1} parent=1 // pred_region
      %s86 = ssub.s32 1024, 1024
      %87 = vsyncadd [#allocation12], %s86
      %s88 = sshll.u32 [#allocation11], 4
      %s89 = int_to_ptr.vmem [resolvable:$true] %s88
      %94 = dma.hbm_to_vmem [thread:$0]  %s6, 1024, %s89, [#allocation12], 64, 64, 4
    $region29: #{tft_decoder_apply.1} parent=1 // pred_fallthru
      _
    // Predicated region
    $region30: #{tft_decoder_apply.1} parent=1 // pred_check
      _
    $region31: #{tft_decoder_apply.1} parent=1 // pred_check_branch
      %96 = sbr.rel (0) target = $region33
    $region32: #{tft_decoder_apply.1} parent=1 // pred_region
      _
    $region33: #{tft_decoder_apply.1} parent=1 // pred_fallthru
      _
    // Predicated region
    $region34: #{tft_decoder_apply.1} parent=1 // pred_check
      _
    $region35: #{tft_decoder_apply.1} parent=1 // pred_check_branch
      %98 = sbr.rel (0) target = $region37
    $region36: #{tft_decoder_apply.1} parent=1 // pred_region
      %s100 = ssub.s32 1024, 1024
      %101 = vsyncadd [#allocation12], %s100
      %s102 = sshll.u32 [#allocation13], 4
      %s103 = int_to_ptr.vmem [resolvable:$true] %s102
      %108 = dma.hbm_to_vmem [thread:$0]  %s8, 1024, %s103, [#allocation12], 64, 64, 4
    $region37: #{tft_decoder_apply.1} parent=1 // pred_fallthru
      _
    // Predicated region
    $region38: #{tft_decoder_apply.1} parent=1 // pred_check
      _
    $region39: #{tft_decoder_apply.1} parent=1 // pred_check_branch
      %110 = sbr.rel (0) target = $region41
    $region40: #{tft_decoder_apply.1} parent=1 // pred_region
      _
    $region41: #{tft_decoder_apply.1} parent=1 // pred_fallthru
      _
    // Predicated region
    $region42: #{tft_decoder_apply.1} parent=1 // pred_check
      _
    $region43: #{tft_decoder_apply.1} parent=1 // pred_check_branch
      %112 = sbr.rel (0) target = $region45
    $region44: #{tft_decoder_apply.1} parent=1 // pred_region
      %s114 = ssub.s32 1024, 1024
      %115 = vsyncadd [#allocation15], %s114
      %s116 = sshll.u32 [#allocation14], 4
      %s117 = int_to_ptr.vmem [resolvable:$true] %s116
      %122 = dma.hbm_to_vmem [thread:$0]  %s10, 1024, %s117, [#allocation15], 64, 64, 4
    $region45: #{tft_decoder_apply.1} parent=1 // pred_fallthru
      _
    // Predicated region
    $region46: #{tft_decoder_apply.1} parent=1 // pred_check
      _
    $region47: #{tft_decoder_apply.1} parent=1 // pred_check_branch
      %124 = sbr.rel (0) target = $region49
    $region48: #{tft_decoder_apply.1} parent=1 // pred_region
      _
    $region49: #{tft_decoder_apply.1} parent=1 // pred_fallthru
      _
    // Predicated region
    $region50: #{tft_decoder_apply.1} parent=1 // pred_check
      _
    $region51: #{tft_decoder_apply.1} parent=1 // pred_check_branch
      %126 = sbr.rel (0) target = $region53
    $region52: #{tft_decoder_apply.1} parent=1 // pred_region
      %s128 = ssub.s32 2048, 2048
      %129 = vsyncadd [#allocation15], %s128
      %s130 = sshll.u32 [#allocation16], 4
      %s131 = int_to_ptr.vmem [resolvable:$true] %s130
      %136 = dma.hbm_to_vmem [thread:$0]  %s12, 2048, %s131, [#allocation15], 128, 128, 8
    $region53: #{tft_decoder_apply.1} parent=1 // pred_fallthru
      _
    // Predicated region
    $region54: #{tft_decoder_apply.1} parent=1 // pred_check
      _
    $region55: #{tft_decoder_apply.1} parent=1 // pred_check_branch
      %138 = sbr.rel (0) target = $region57
    $region56: #{tft_decoder_apply.1} parent=1 // pred_region
      _
    $region57: #{tft_decoder_apply.1} parent=1 // pred_fallthru
      _
    // Predicated region
    $region58: #{tft_decoder_apply.1} parent=1 // pred_check
      _
    $region59: #{tft_decoder_apply.1} parent=1 // pred_check_branch
      %140 = sbr.rel (0) target = $region61
    $region60: #{tft_decoder_apply.1} parent=1 // pred_region
      %141 = dma.done [#allocation3], 4096
    $region61: #{tft_decoder_apply.1} parent=1 // pred_fallthru
      _
    // Predicated region
    $region62: #{tft_decoder_apply.1} parent=1 // pred_check
      _
    $region63: #{tft_decoder_apply.1} parent=1 // pred_check_branch
      %143 = sbr.rel (0) target = $region65
    $region64: #{tft_decoder_apply.1} parent=1 // pred_region
      %144 = dma.done [#allocation6], 128
    $region65: #{tft_decoder_apply.1} parent=1 // pred_fallthru
      _
    // Predicated region
    $region66: #{tft_decoder_apply.1} parent=1 // pred_check
      _
    $region67: #{tft_decoder_apply.1} parent=1 // pred_check_branch
      %146 = sbr.rel (0) target = $region69
    $region68: #{tft_decoder_apply.1} parent=1 // pred_region
      %147 = dma.done [#allocation6], 128
    $region69: #{tft_decoder_apply.1} parent=1 // pred_fallthru
      _
    // Predicated region
    $region70: #{tft_decoder_apply.1} parent=1 // pred_check
      _
    $region71: #{tft_decoder_apply.1} parent=1 // pred_check_branch
      %149 = sbr.rel (0) target = $region73
    $region72: #{tft_decoder_apply.1} parent=1 // pred_region
      %150 = dma.done [#allocation9], 4096
    $region73: #{tft_decoder_apply.1} parent=1 // pred_fallthru
      _
    // Predicated region
    $region74: #{tft_decoder_apply.1} parent=1 // pred_check
      _
    $region75: #{tft_decoder_apply.1} parent=1 // pred_check_branch
      %152 = sbr.rel (0) target = $region77
    $region76: #{tft_decoder_apply.1} parent=1 // pred_region
      %153 = dma.done [#allocation9], 4096
    $region77: #{tft_decoder_apply.1} parent=1 // pred_fallthru
      _
    // Predicated region
    $region78: #{tft_decoder_apply.1} parent=1 // pred_check
      _
    $region79: #{tft_decoder_apply.1} parent=1 // pred_check_branch
      %155 = sbr.rel (0) target = $region81
    $region80: #{tft_decoder_apply.1} parent=1 // pred_region
      %156 = dma.done [#allocation12], 1024
    $region81: #{tft_decoder_apply.1} parent=1 // pred_fallthru
      _
    // Predicated region
    $region82: #{tft_decoder_apply.1} parent=1 // pred_check
      _
    $region83: #{tft_decoder_apply.1} parent=1 // pred_check_branch
      %158 = sbr.rel (0) target = $region85
    $region84: #{tft_decoder_apply.1} parent=1 // pred_region
      %159 = dma.done [#allocation12], 1024
    $region85: #{tft_decoder_apply.1} parent=1 // pred_fallthru
      _
    // Predicated region
    $region86: #{tft_decoder_apply.1} parent=1 // pred_check
      _
    $region87: #{tft_decoder_apply.1} parent=1 // pred_check_branch
      %161 = sbr.rel (0) target = $region89
    $region88: #{tft_decoder_apply.1} parent=1 // pred_region
      %162 = dma.done [#allocation15], 1024
    $region89: #{tft_decoder_apply.1} parent=1 // pred_fallthru
      _
    // Predicated region
    $region90: #{tft_decoder_apply.1} parent=1 // pred_check
      _
    $region91: #{tft_decoder_apply.1} parent=1 // pred_check_branch
      %164 = sbr.rel (0) target = $region93
    $region92: #{tft_decoder_apply.1} parent=1 // pred_region
      %165 = dma.done [#allocation15], 2048
    $region93: #{tft_decoder_apply.1} parent=1 // pred_fallthru
      _
    %v167 = vld [vmem:[#allocation2] sm:$0xff]
    %v168 = vld [vmem:[#allocation2 + $0x8] sm:$0xff]
    %v169 = vld [vmem:[#allocation2 + $0x10] sm:$0xff]
    %v170 = vld [vmem:[#allocation2 + $0x18] sm:$0xff]
    %v171 = vld [vmem:[#allocation2 + $0x20] sm:$0xff]
    %v172 = vld [vmem:[#allocation2 + $0x28] sm:$0xff]
    %v173 = vld [vmem:[#allocation2 + $0x30] sm:$0xff]
    %v174 = vld [vmem:[#allocation2 + $0x38] sm:$0xff]
    %v175 = vld [vmem:[#allocation2 + $0x40] sm:$0xff]
    %v176 = vld [vmem:[#allocation2 + $0x48] sm:$0xff]
    %v177 = vld [vmem:[#allocation2 + $0x50] sm:$0xff]
    %v178 = vld [vmem:[#allocation2 + $0x58] sm:$0xff]
    %v179 = vld [vmem:[#allocation2 + $0x60] sm:$0xff]
    %v180 = vld [vmem:[#allocation2 + $0x68] sm:$0xff]
    %v181 = vld [vmem:[#allocation2 + $0x70] sm:$0xff]
    %v182 = vld [vmem:[#allocation2 + $0x78] sm:$0xff]
    %v183 = vld [vmem:[#allocation2 + $0x80] sm:$0xff]
    %v184 = vld [vmem:[#allocation2 + $0x88] sm:$0xff]
    %v185 = vld [vmem:[#allocation2 + $0x90] sm:$0xff]
    %v186 = vld [vmem:[#allocation2 + $0x98] sm:$0xff]
    %v187 = vld [vmem:[#allocation2 + $0xa0] sm:$0xff]
    %v188 = vld [vmem:[#allocation2 + $0xa8] sm:$0xff]
    %v189 = vld [vmem:[#allocation2 + $0xb0] sm:$0xff]
    %v190 = vld [vmem:[#allocation2 + $0xb8] sm:$0xff]
    %v191 = vld [vmem:[#allocation2 + $0xc0] sm:$0xff]
    %v192 = vld [vmem:[#allocation2 + $0xc8] sm:$0xff]
    %v193 = vld [vmem:[#allocation2 + $0xd0] sm:$0xff]
    %v194 = vld [vmem:[#allocation2 + $0xd8] sm:$0xff]
    %v195 = vld [vmem:[#allocation2 + $0xe0] sm:$0xff]
    %v196 = vld [vmem:[#allocation2 + $0xe8] sm:$0xff]
    %v197 = vld [vmem:[#allocation2 + $0xf0] sm:$0xff]
    %v198 = vld [vmem:[#allocation2 + $0xf8] sm:$0xff]
    %v199 = vadd.f32 %v167, %v168
    %v200 = vadd.f32 %v199, %v169
    %v201 = vadd.f32 %v200, %v170
    %v202 = vrot.slane %v201, 4
    %v203 = vadd.f32 %v201, %v202
    %v204 = vrot.slane %v203, 2
    %v205 = vadd.f32 %v203, %v204
    %v206 = vrot.slane %v205, 1
    %v207 = vadd.f32 %v205, %v206
    %v208 = vadd.f32 %v171, %v172
    %v209 = vadd.f32 %v208, %v173
    %v210 = vadd.f32 %v209, %v174
    %v211 = vrot.slane %v210, 4
    %v212 = vadd.f32 %v210, %v211
    %v213 = vrot.slane %v212, 2
    %v214 = vadd.f32 %v212, %v213
    %v215 = vrot.slane %v214, 1
    %v216 = vadd.f32 %v214, %v215
    %v217 = vadd.f32 %v175, %v176
    %v218 = vadd.f32 %v217, %v177
    %v219 = vadd.f32 %v218, %v178
    %v220 = vrot.slane %v219, 4
    %v221 = vadd.f32 %v219, %v220
    %v222 = vrot.slane %v221, 2
    %v223 = vadd.f32 %v221, %v222
    %v224 = vrot.slane %v223, 1
    %v225 = vadd.f32 %v223, %v224
    %v226 = vadd.f32 %v179, %v180
    %v227 = vadd.f32 %v226, %v181
    %v228 = vadd.f32 %v227, %v182
    %v229 = vrot.slane %v228, 4
    %v230 = vadd.f32 %v228, %v229
    %v231 = vrot.slane %v230, 2
    %v232 = vadd.f32 %v230, %v231
    %v233 = vrot.slane %v232, 1
    %v234 = vadd.f32 %v232, %v233
    %v235 = vadd.f32 %v183, %v184
    %v236 = vadd.f32 %v235, %v185
    %v237 = vadd.f32 %v236, %v186
    %v238 = vrot.slane %v237, 4
    %v239 = vadd.f32 %v237, %v238
    %v240 = vrot.slane %v239, 2
    %v241 = vadd.f32 %v239, %v240
    %v242 = vrot.slane %v241, 1
    %v243 = vadd.f32 %v241, %v242
    %v244 = vadd.f32 %v187, %v188
    %v245 = vadd.f32 %v244, %v189
    %v246 = vadd.f32 %v245, %v190
    %v247 = vrot.slane %v246, 4
    %v248 = vadd.f32 %v246, %v247
    %v249 = vrot.slane %v248, 2
    %v250 = vadd.f32 %v248, %v249
    %v251 = vrot.slane %v250, 1
    %v252 = vadd.f32 %v250, %v251
    %v253 = vadd.f32 %v191, %v192
    %v254 = vadd.f32 %v253, %v193
    %v255 = vadd.f32 %v254, %v194
    %v256 = vrot.slane %v255, 4
    %v257 = vadd.f32 %v255, %v256
    %v258 = vrot.slane %v257, 2
    %v259 = vadd.f32 %v257, %v258
    %v260 = vrot.slane %v259, 1
    %v261 = vadd.f32 %v259, %v260
    %v262 = vadd.f32 %v195, %v196
    %v263 = vadd.f32 %v262, %v197
    %v264 = vadd.f32 %v263, %v198
    %v265 = vrot.slane %v264, 4
    %v266 = vadd.f32 %v264, %v265
    %v267 = vrot.slane %v266, 2
    %v268 = vadd.f32 %v266, %v267
    %v269 = vrot.slane %v268, 1
    %v270 = vadd.f32 %v268, %v269
    %v271 = vpack.c.bf16 %v207, %v207
    %v272 = vpack.c.bf16 %v216, %v216
    %v273 = vpack.c.bf16 %v225, %v225
    %v274 = vpack.c.bf16 %v234, %v234
    %v275 = vpack.c.bf16 %v243, %v243
    %v276 = vpack.c.bf16 %v252, %v252
    %v277 = vpack.c.bf16 %v261, %v261
    %v278 = vpack.c.bf16 %v270, %v270
    %v279 = vld [vmem:[#allocation8] sm:$0xff]
    %v280 = vld [vmem:[#allocation8 + $0x8] sm:$0xff]
    %v281 = vld [vmem:[#allocation8 + $0x10] sm:$0xff]
    %v282 = vld [vmem:[#allocation8 + $0x18] sm:$0xff]
    %v283 = vld [vmem:[#allocation8 + $0x20] sm:$0xff]
    %v284 = vld [vmem:[#allocation8 + $0x28] sm:$0xff]
    %v285 = vld [vmem:[#allocation8 + $0x30] sm:$0xff]
    %v286 = vld [vmem:[#allocation8 + $0x38] sm:$0xff]
    %v287 = vld [vmem:[#allocation8 + $0x40] sm:$0xff]
    %v288 = vld [vmem:[#allocation8 + $0x48] sm:$0xff]
    %v289 = vld [vmem:[#allocation8 + $0x50] sm:$0xff]
    %v290 = vld [vmem:[#allocation8 + $0x58] sm:$0xff]
    %v291 = vld [vmem:[#allocation8 + $0x60] sm:$0xff]
    %v292 = vld [vmem:[#allocation8 + $0x68] sm:$0xff]
    %v293 = vld [vmem:[#allocation8 + $0x70] sm:$0xff]
    %v294 = vld [vmem:[#allocation8 + $0x78] sm:$0xff]
    %v295 = vld [vmem:[#allocation8 + $0x80] sm:$0xff]
    %v296 = vld [vmem:[#allocation8 + $0x88] sm:$0xff]
    %v297 = vld [vmem:[#allocation8 + $0x90] sm:$0xff]
    %v298 = vld [vmem:[#allocation8 + $0x98] sm:$0xff]
    %v299 = vld [vmem:[#allocation8 + $0xa0] sm:$0xff]
    %v300 = vld [vmem:[#allocation8 + $0xa8] sm:$0xff]
    %v301 = vld [vmem:[#allocation8 + $0xb0] sm:$0xff]
    %v302 = vld [vmem:[#allocation8 + $0xb8] sm:$0xff]
    %v303 = vld [vmem:[#allocation8 + $0xc0] sm:$0xff]
    %v304 = vld [vmem:[#allocation8 + $0xc8] sm:$0xff]
    %v305 = vld [vmem:[#allocation8 + $0xd0] sm:$0xff]
    %v306 = vld [vmem:[#allocation8 + $0xd8] sm:$0xff]
    %v307 = vld [vmem:[#allocation8 + $0xe0] sm:$0xff]
    %v308 = vld [vmem:[#allocation8 + $0xe8] sm:$0xff]
    %v309 = vld [vmem:[#allocation8 + $0xf0] sm:$0xff]
    %v310 = vld [vmem:[#allocation8 + $0xf8] sm:$0xff]
    %v311 = vld [vmem:[#allocation5] sm:$0xff]
    %v312 = vpack.c.bf16 %v311, %v311
    %v313 = vld [vmem:[#allocation10] sm:$0xff]
    %v314 = vld [vmem:[#allocation10 + $0x8] sm:$0xff]
    %v315 = vld [vmem:[#allocation10 + $0x10] sm:$0xff]
    %v316 = vld [vmem:[#allocation10 + $0x18] sm:$0xff]
    %v317 = vld [vmem:[#allocation10 + $0x20] sm:$0xff]
    %v318 = vld [vmem:[#allocation10 + $0x28] sm:$0xff]
    %v319 = vld [vmem:[#allocation10 + $0x30] sm:$0xff]
    %v320 = vld [vmem:[#allocation10 + $0x38] sm:$0xff]
    %v321 = vld [vmem:[#allocation10 + $0x40] sm:$0xff]
    %v322 = vld [vmem:[#allocation10 + $0x48] sm:$0xff]
    %v323 = vld [vmem:[#allocation10 + $0x50] sm:$0xff]
    %v324 = vld [vmem:[#allocation10 + $0x58] sm:$0xff]
    %v325 = vld [vmem:[#allocation10 + $0x60] sm:$0xff]
    %v326 = vld [vmem:[#allocation10 + $0x68] sm:$0xff]
    %v327 = vld [vmem:[#allocation10 + $0x70] sm:$0xff]
    %v328 = vld [vmem:[#allocation10 + $0x78] sm:$0xff]
    %v329 = vld [vmem:[#allocation10 + $0x80] sm:$0xff]
    %v330 = vld [vmem:[#allocation10 + $0x88] sm:$0xff]
    %v331 = vld [vmem:[#allocation10 + $0x90] sm:$0xff]
    %v332 = vld [vmem:[#allocation10 + $0x98] sm:$0xff]
    %v333 = vld [vmem:[#allocation10 + $0xa0] sm:$0xff]
    %v334 = vld [vmem:[#allocation10 + $0xa8] sm:$0xff]
    %v335 = vld [vmem:[#allocation10 + $0xb0] sm:$0xff]
    %v336 = vld [vmem:[#allocation10 + $0xb8] sm:$0xff]
    %v337 = vld [vmem:[#allocation10 + $0xc0] sm:$0xff]
    %v338 = vld [vmem:[#allocation10 + $0xc8] sm:$0xff]
    %v339 = vld [vmem:[#allocation10 + $0xd0] sm:$0xff]
    %v340 = vld [vmem:[#allocation10 + $0xd8] sm:$0xff]
    %v341 = vld [vmem:[#allocation10 + $0xe0] sm:$0xff]
    %v342 = vld [vmem:[#allocation10 + $0xe8] sm:$0xff]
    %v343 = vld [vmem:[#allocation10 + $0xf0] sm:$0xff]
    %v344 = vld [vmem:[#allocation10 + $0xf8] sm:$0xff]
    %v377 = vunpack.c.l.b16 %v313
    %v378 = vunpack.c.h.b16 %v313
    %v379 = vunpack.c.l.b16 %v314
    %v380 = vunpack.c.h.b16 %v314
    %v381 = vunpack.c.l.b16 %v315
    %v382 = vunpack.c.h.b16 %v315
    %v383 = vunpack.c.l.b16 %v316
    %v384 = vunpack.c.h.b16 %v316
    %v385 = vunpack.c.l.b16 %v317
    %v386 = vunpack.c.h.b16 %v317
    %v387 = vunpack.c.l.b16 %v318
    %v388 = vunpack.c.h.b16 %v318
    %v389 = vunpack.c.l.b16 %v319
    %v390 = vunpack.c.h.b16 %v319
    %v391 = vunpack.c.l.b16 %v320
    %v392 = vunpack.c.h.b16 %v320
    %v393 = vunpack.c.l.b16 %v321
    %v394 = vunpack.c.h.b16 %v321
    %v395 = vunpack.c.l.b16 %v322
    %v396 = vunpack.c.h.b16 %v322
    %v397 = vunpack.c.l.b16 %v323
    %v398 = vunpack.c.h.b16 %v323
    %v399 = vunpack.c.l.b16 %v324
    %v400 = vunpack.c.h.b16 %v324
    %v401 = vunpack.c.l.b16 %v325
    %v402 = vunpack.c.h.b16 %v325
    %v403 = vunpack.c.l.b16 %v326
    %v404 = vunpack.c.h.b16 %v326
    %v405 = vunpack.c.l.b16 %v327
    %v406 = vunpack.c.h.b16 %v327
    %v407 = vunpack.c.l.b16 %v328
    %v408 = vunpack.c.h.b16 %v328
    %v409 = vunpack.c.l.b16 %v329
    %v410 = vunpack.c.h.b16 %v329
    %v411 = vunpack.c.l.b16 %v330
    %v412 = vunpack.c.h.b16 %v330
    %v413 = vunpack.c.l.b16 %v331
    %v414 = vunpack.c.h.b16 %v331
    %v415 = vunpack.c.l.b16 %v332
    %v416 = vunpack.c.h.b16 %v332
    %v417 = vunpack.c.l.b16 %v333
    %v418 = vunpack.c.h.b16 %v333
    %v419 = vunpack.c.l.b16 %v334
    %v420 = vunpack.c.h.b16 %v334
    %v421 = vunpack.c.l.b16 %v335
    %v422 = vunpack.c.h.b16 %v335
    %v423 = vunpack.c.l.b16 %v336
    %v424 = vunpack.c.h.b16 %v336
    %v425 = vunpack.c.l.b16 %v337
    %v426 = vunpack.c.h.b16 %v337
    %v427 = vunpack.c.l.b16 %v338
    %v428 = vunpack.c.h.b16 %v338
    %v429 = vunpack.c.l.b16 %v339
    %v430 = vunpack.c.h.b16 %v339
    %v431 = vunpack.c.l.b16 %v340
    %v432 = vunpack.c.h.b16 %v340
    %v433 = vunpack.c.l.b16 %v341
    %v434 = vunpack.c.h.b16 %v341
    %v435 = vunpack.c.l.b16 %v342
    %v436 = vunpack.c.h.b16 %v342
    %v437 = vunpack.c.l.b16 %v343
    %v438 = vunpack.c.h.b16 %v343
    %v439 = vunpack.c.l.b16 %v344
    %v440 = vunpack.c.h.b16 %v344
    %v441 = vpack.c.b16 %v381, %v377
    %v442 = vpack.c.b16 %v382, %v378
    %v443 = vpack.c.b16 %v383, %v379
    %v444 = vpack.c.b16 %v384, %v380
    %v445 = vpack.c.b16 %v389, %v385
    %v446 = vpack.c.b16 %v390, %v386
    %v447 = vpack.c.b16 %v391, %v387
    %v448 = vpack.c.b16 %v392, %v388
    %v449 = vpack.c.b16 %v397, %v393
    %v450 = vpack.c.b16 %v398, %v394
    %v451 = vpack.c.b16 %v399, %v395
    %v452 = vpack.c.b16 %v400, %v396
    %v453 = vpack.c.b16 %v405, %v401
    %v454 = vpack.c.b16 %v406, %v402
    %v455 = vpack.c.b16 %v407, %v403
    %v456 = vpack.c.b16 %v408, %v404
    %v457 = vpack.c.b16 %v413, %v409
    %v458 = vpack.c.b16 %v414, %v410
    %v459 = vpack.c.b16 %v415, %v411
    %v460 = vpack.c.b16 %v416, %v412
    %v461 = vpack.c.b16 %v421, %v417
    %v462 = vpack.c.b16 %v422, %v418
    %v463 = vpack.c.b16 %v423, %v419
    %v464 = vpack.c.b16 %v424, %v420
    %v465 = vpack.c.b16 %v429, %v425
    %v466 = vpack.c.b16 %v430, %v426
    %v467 = vpack.c.b16 %v431, %v427
    %v468 = vpack.c.b16 %v432, %v428
    %v469 = vpack.c.b16 %v437, %v433
    %v470 = vpack.c.b16 %v438, %v434
    %v471 = vpack.c.b16 %v439, %v435
    %v472 = vpack.c.b16 %v440, %v436
    %505 = vmatprep.subr.bf16.mxu0 %v470
    %506 = vmatpush1.bf16.msra.mxu0 %v469
    %507 = vmatprep.subr.bf16.mxu0 %v466
    %508 = vmatpush1.bf16.msra.mxu0 %v465
    %509 = vmatprep.subr.bf16.mxu0 %v462
    %510 = vmatpush1.bf16.msra.mxu0 %v461
    %511 = vmatprep.subr.bf16.mxu0 %v458
    %512 = vmatpush1.bf16.msra.mxu0 %v457
    %513 = vmatprep.subr.bf16.mxu0 %v454
    %514 = vmatpush1.bf16.msra.mxu0 %v453
    %515 = vmatprep.subr.bf16.mxu0 %v450
    %516 = vmatpush1.bf16.msra.mxu0 %v449
    %517 = vmatprep.subr.bf16.mxu0 %v446
    %518 = vmatpush1.bf16.msra.mxu0 %v445
    %519 = vmatprep.subr.bf16.mxu0 %v442
    %520 = vmatpush1.bf16.msra.mxu0 %v441
    %521 = vmatprep.subr.bf16.mxu0 0
    %522 = vmatpush2.bf16.msra.mxu0 0
    %523 = vmatprep.subr.bf16.mxu0 0
    %524 = vmatpush2.bf16.msra.mxu0 0
    %525 = vmatprep.subr.bf16.mxu0 0
    %526 = vmatpush2.bf16.msra.mxu0 0
    %527 = vmatprep.subr.bf16.mxu0 0
    %528 = vmatpush2.bf16.msra.mxu0 0
    %529 = vmatprep.subr.bf16.mxu0 0
    %530 = vmatpush2.bf16.msra.mxu0 0
    %531 = vmatprep.subr.bf16.mxu0 0
    %532 = vmatpush2.bf16.msra.mxu0 0
    %533 = vmatprep.subr.bf16.mxu0 0
    %534 = vmatpush2.bf16.msra.mxu0 0
    %535 = vmatprep.subr.bf16.mxu0 0
    %536 = vmatpush2.bf16.msra.mxu0 0
    %537 = vmatprep.mubr.bf16.mxu0 0
    %538 = vmatmul.mubr.bf16.gmra.mxu0 %v312
    %v539 = vpop.f32.mrf.mxu0
    %v540 = vadd.f32 0.0, %v539
    %v541 = vpop.f32.mrf.mxu0
    %v542 = vadd.f32 0.0, %v541
    %v543 = vpop.f32.mrf.mxu0
    %v544 = vpop.f32.mrf.mxu0
    %545 = vdwg.mxu0
    %546 = vmatprep.subr.bf16.mxu0 %v472
    %547 = vmatpush1.bf16.msra.mxu0 %v471
    %548 = vmatprep.subr.bf16.mxu0 %v468
    %549 = vmatpush1.bf16.msra.mxu0 %v467
    %550 = vmatprep.subr.bf16.mxu0 %v464
    %551 = vmatpush1.bf16.msra.mxu0 %v463
    %552 = vmatprep.subr.bf16.mxu0 %v460
    %553 = vmatpush1.bf16.msra.mxu0 %v459
    %554 = vmatprep.subr.bf16.mxu0 %v456
    %555 = vmatpush1.bf16.msra.mxu0 %v455
    %556 = vmatprep.subr.bf16.mxu0 %v452
    %557 = vmatpush1.bf16.msra.mxu0 %v451
    %558 = vmatprep.subr.bf16.mxu0 %v448
    %559 = vmatpush1.bf16.msra.mxu0 %v447
    %560 = vmatprep.subr.bf16.mxu0 %v444
    %561 = vmatpush1.bf16.msra.mxu0 %v443
    %562 = vmatprep.subr.bf16.mxu0 0
    %563 = vmatpush2.bf16.msra.mxu0 0
    %564 = vmatprep.subr.bf16.mxu0 0
    %565 = vmatpush2.bf16.msra.mxu0 0
    %566 = vmatprep.subr.bf16.mxu0 0
    %567 = vmatpush2.bf16.msra.mxu0 0
    %568 = vmatprep.subr.bf16.mxu0 0
    %569 = vmatpush2.bf16.msra.mxu0 0
    %570 = vmatprep.subr.bf16.mxu0 0
    %571 = vmatpush2.bf16.msra.mxu0 0
    %572 = vmatprep.subr.bf16.mxu0 0
    %573 = vmatpush2.bf16.msra.mxu0 0
    %574 = vmatprep.subr.bf16.mxu0 0
    %575 = vmatpush2.bf16.msra.mxu0 0
    %576 = vmatprep.subr.bf16.mxu0 0
    %577 = vmatpush2.bf16.msra.mxu0 0
    %578 = vmatprep.mubr.bf16.mxu0 0
    %579 = vmatmul.mubr.bf16.gmra.mxu0 %v312
    %v580 = vpop.f32.mrf.mxu0
    %v581 = vadd.f32 0.0, %v580
    %v582 = vpop.f32.mrf.mxu0
    %v583 = vadd.f32 0.0, %v582
    %v584 = vpop.f32.mrf.mxu0
    %v585 = vpop.f32.mrf.mxu0
    %586 = vdwg.mxu0
    %v595 = vunpack.c.l.b16 %v271
    %v596 = vunpack.c.l.b16 %v272
    %v597 = vunpack.c.l.b16 %v273
    %v598 = vunpack.c.l.b16 %v274
    %v599 = vunpack.c.l.b16 %v275
    %v600 = vunpack.c.l.b16 %v276
    %v601 = vunpack.c.l.b16 %v277
    %v602 = vunpack.c.l.b16 %v278
    %vm603 = vcmask 1041409
    %v604 = vsel %vm603, %v596, %v595
    %vm605 = vcmask 1042434
    %v606 = vsel %vm605, %v597, %v604
    %vm607 = vcmask 1043459
    %v608 = vsel %vm607, %v598, %v606
    %vm609 = vcmask 1044484
    %v610 = vsel %vm609, %v599, %v608
    %vm611 = vcmask 1045509
    %v612 = vsel %vm611, %v600, %v610
    %vm613 = vcmask 1046534
    %v614 = vsel %vm613, %v601, %v612
    %vm615 = vcmask 1047559
    %v616 = vsel %vm615, %v602, %v614
    %v617 = vpack.c.b16 %v616, %v616
    %v651 = vunpack.c.l.b16 %v279
    %v652 = vunpack.c.h.b16 %v279
    %v653 = vunpack.c.l.b16 %v280
    %v654 = vunpack.c.h.b16 %v280
    %v655 = vunpack.c.l.b16 %v281
    %v656 = vunpack.c.h.b16 %v281
    %v657 = vunpack.c.l.b16 %v282
    %v658 = vunpack.c.h.b16 %v282
    %v659 = vunpack.c.l.b16 %v283
    %v660 = vunpack.c.h.b16 %v283
    %v661 = vunpack.c.l.b16 %v284
    %v662 = vunpack.c.h.b16 %v284
    %v663 = vunpack.c.l.b16 %v285
    %v664 = vunpack.c.h.b16 %v285
    %v665 = vunpack.c.l.b16 %v286
    %v666 = vunpack.c.h.b16 %v286
    %v667 = vunpack.c.l.b16 %v287
    %v668 = vunpack.c.h.b16 %v287
    %v669 = vunpack.c.l.b16 %v288
    %v670 = vunpack.c.h.b16 %v288
    %v671 = vunpack.c.l.b16 %v289
    %v672 = vunpack.c.h.b16 %v289
    %v673 = vunpack.c.l.b16 %v290
    %v674 = vunpack.c.h.b16 %v290
    %v675 = vunpack.c.l.b16 %v291
    %v676 = vunpack.c.h.b16 %v291
    %v677 = vunpack.c.l.b16 %v292
    %v678 = vunpack.c.h.b16 %v292
    %v679 = vunpack.c.l.b16 %v293
    %v680 = vunpack.c.h.b16 %v293
    %v681 = vunpack.c.l.b16 %v294
    %v682 = vunpack.c.h.b16 %v294
    %v683 = vunpack.c.l.b16 %v295
    %v684 = vunpack.c.h.b16 %v295
    %v685 = vunpack.c.l.b16 %v296
    %v686 = vunpack.c.h.b16 %v296
    %v687 = vunpack.c.l.b16 %v297
    %v688 = vunpack.c.h.b16 %v297
    %v689 = vunpack.c.l.b16 %v298
    %v690 = vunpack.c.h.b16 %v298
    %v691 = vunpack.c.l.b16 %v299
    %v692 = vunpack.c.h.b16 %v299
    %v693 = vunpack.c.l.b16 %v300
    %v694 = vunpack.c.h.b16 %v300
    %v695 = vunpack.c.l.b16 %v301
    %v696 = vunpack.c.h.b16 %v301
    %v697 = vunpack.c.l.b16 %v302
    %v698 = vunpack.c.h.b16 %v302
    %v699 = vunpack.c.l.b16 %v303
    %v700 = vunpack.c.h.b16 %v303
    %v701 = vunpack.c.l.b16 %v304
    %v702 = vunpack.c.h.b16 %v304
    %v703 = vunpack.c.l.b16 %v305
    %v704 = vunpack.c.h.b16 %v305
    %v705 = vunpack.c.l.b16 %v306
    %v706 = vunpack.c.h.b16 %v306
    %v707 = vunpack.c.l.b16 %v307
    %v708 = vunpack.c.h.b16 %v307
    %v709 = vunpack.c.l.b16 %v308
    %v710 = vunpack.c.h.b16 %v308
    %v711 = vunpack.c.l.b16 %v309
    %v712 = vunpack.c.h.b16 %v309
    %v713 = vunpack.c.l.b16 %v310
    %v714 = vunpack.c.h.b16 %v310
    %v715 = vpack.c.b16 %v655, %v651
    %v716 = vpack.c.b16 %v656, %v652
    %v717 = vpack.c.b16 %v657, %v653
    %v718 = vpack.c.b16 %v658, %v654
    %v719 = vpack.c.b16 %v663, %v659
    %v720 = vpack.c.b16 %v664, %v660
    %v721 = vpack.c.b16 %v665, %v661
    %v722 = vpack.c.b16 %v666, %v662
    %v723 = vpack.c.b16 %v671, %v667
    %v724 = vpack.c.b16 %v672, %v668
    %v725 = vpack.c.b16 %v673, %v669
    %v726 = vpack.c.b16 %v674, %v670
    %v727 = vpack.c.b16 %v679, %v675
    %v728 = vpack.c.b16 %v680, %v676
    %v729 = vpack.c.b16 %v681, %v677
    %v730 = vpack.c.b16 %v682, %v678
    %v731 = vpack.c.b16 %v687, %v683
    %v732 = vpack.c.b16 %v688, %v684
    %v733 = vpack.c.b16 %v689, %v685
    %v734 = vpack.c.b16 %v690, %v686
    %v735 = vpack.c.b16 %v695, %v691
    %v736 = vpack.c.b16 %v696, %v692
    %v737 = vpack.c.b16 %v697, %v693
    %v738 = vpack.c.b16 %v698, %v694
    %v739 = vpack.c.b16 %v703, %v699
    %v740 = vpack.c.b16 %v704, %v700
    %v741 = vpack.c.b16 %v705, %v701
    %v742 = vpack.c.b16 %v706, %v702
    %v743 = vpack.c.b16 %v711, %v707
    %v744 = vpack.c.b16 %v712, %v708
    %v745 = vpack.c.b16 %v713, %v709
    %v746 = vpack.c.b16 %v714, %v710
    %779 = vmatprep.subr.bf16.mxu0 %v744
    %780 = vmatpush1.bf16.msra.mxu0 %v743
    %781 = vmatprep.subr.bf16.mxu0 %v740
    %782 = vmatpush1.bf16.msra.mxu0 %v739
    %783 = vmatprep.subr.bf16.mxu0 %v736
    %784 = vmatpush1.bf16.msra.mxu0 %v735
    %785 = vmatprep.subr.bf16.mxu0 %v732
    %786 = vmatpush1.bf16.msra.mxu0 %v731
    %787 = vmatprep.subr.bf16.mxu0 %v728
    %788 = vmatpush1.bf16.msra.mxu0 %v727
    %789 = vmatprep.subr.bf16.mxu0 %v724
    %790 = vmatpush1.bf16.msra.mxu0 %v723
    %791 = vmatprep.subr.bf16.mxu0 %v720
    %792 = vmatpush1.bf16.msra.mxu0 %v719
    %793 = vmatprep.subr.bf16.mxu0 %v716
    %794 = vmatpush1.bf16.msra.mxu0 %v715
    %795 = vmatprep.subr.bf16.mxu0 0
    %796 = vmatpush2.bf16.msra.mxu0 0
    %797 = vmatprep.subr.bf16.mxu0 0
    %798 = vmatpush2.bf16.msra.mxu0 0
    %799 = vmatprep.subr.bf16.mxu0 0
    %800 = vmatpush2.bf16.msra.mxu0 0
    %801 = vmatprep.subr.bf16.mxu0 0
    %802 = vmatpush2.bf16.msra.mxu0 0
    %803 = vmatprep.subr.bf16.mxu0 0
    %804 = vmatpush2.bf16.msra.mxu0 0
    %805 = vmatprep.subr.bf16.mxu0 0
    %806 = vmatpush2.bf16.msra.mxu0 0
    %807 = vmatprep.subr.bf16.mxu0 0
    %808 = vmatpush2.bf16.msra.mxu0 0
    %809 = vmatprep.subr.bf16.mxu0 0
    %810 = vmatpush2.bf16.msra.mxu0 0
    %811 = vmatprep.mubr.bf16.mxu0 0
    %812 = vmatmul.mubr.bf16.gmra.mxu0 %v617
    %v813 = vpop.f32.mrf.mxu0
    %v814 = vadd.f32 %v540, %v813
    %v815 = vpop.f32.mrf.mxu0
    %v816 = vadd.f32 %v542, %v815
    %v817 = vpop.f32.mrf.mxu0
    %v818 = vpop.f32.mrf.mxu0
    %819 = vdwg.mxu0
    %820 = vmatprep.subr.bf16.mxu0 %v746
    %821 = vmatpush1.bf16.msra.mxu0 %v745
    %822 = vmatprep.subr.bf16.mxu0 %v742
    %823 = vmatpush1.bf16.msra.mxu0 %v741
    %824 = vmatprep.subr.bf16.mxu0 %v738
    %825 = vmatpush1.bf16.msra.mxu0 %v737
    %826 = vmatprep.subr.bf16.mxu0 %v734
    %827 = vmatpush1.bf16.msra.mxu0 %v733
    %828 = vmatprep.subr.bf16.mxu0 %v730
    %829 = vmatpush1.bf16.msra.mxu0 %v729
    %830 = vmatprep.subr.bf16.mxu0 %v726
    %831 = vmatpush1.bf16.msra.mxu0 %v725
    %832 = vmatprep.subr.bf16.mxu0 %v722
    %833 = vmatpush1.bf16.msra.mxu0 %v721
    %834 = vmatprep.subr.bf16.mxu0 %v718
    %835 = vmatpush1.bf16.msra.mxu0 %v717
    %836 = vmatprep.subr.bf16.mxu0 0
    %837 = vmatpush2.bf16.msra.mxu0 0
    %838 = vmatprep.subr.bf16.mxu0 0
    %839 = vmatpush2.bf16.msra.mxu0 0
    %840 = vmatprep.subr.bf16.mxu0 0
    %841 = vmatpush2.bf16.msra.mxu0 0
    %842 = vmatprep.subr.bf16.mxu0 0
    %843 = vmatpush2.bf16.msra.mxu0 0
    %844 = vmatprep.subr.bf16.mxu0 0
    %845 = vmatpush2.bf16.msra.mxu0 0
    %846 = vmatprep.subr.bf16.mxu0 0
    %847 = vmatpush2.bf16.msra.mxu0 0
    %848 = vmatprep.subr.bf16.mxu0 0
    %849 = vmatpush2.bf16.msra.mxu0 0
    %850 = vmatprep.subr.bf16.mxu0 0
    %851 = vmatpush2.bf16.msra.mxu0 0
    %852 = vmatprep.mubr.bf16.mxu0 0
    %853 = vmatmul.mubr.bf16.gmra.mxu0 %v617
    %v854 = vpop.f32.mrf.mxu0
    %v855 = vadd.f32 %v581, %v854
    %v856 = vpop.f32.mrf.mxu0
    %v857 = vadd.f32 %v583, %v856
    %v858 = vpop.f32.mrf.mxu0
    %v859 = vpop.f32.mrf.mxu0
    %860 = vdwg.mxu0
    %v861 = vld [vmem:[%s5] sm:$0xf]
    %v863 = vlaneseq
    %v864 = vshrl.u32 %v863, 7
    %v865 = vsub.s32 0, %v864
    %v866 = vrot.slane %v861, %v865
    %v867 = vlaneseq
    %v868 = vshrl.u32 %v867, 7
    %v869 = vsub.s32 1, %v868
    %v870 = vrot.slane %v861, %v869
    %v871 = vlaneseq
    %v872 = vshrl.u32 %v871, 7
    %v873 = vsub.s32 2, %v872
    %v874 = vrot.slane %v861, %v873
    %v875 = vlaneseq
    %v876 = vshrl.u32 %v875, 7
    %v877 = vsub.s32 3, %v876
    %v878 = vrot.slane %v861, %v877
    %v883 = vadd.f32 %v814, %v866
    %v884 = vadd.f32 %v816, %v870
    %v885 = vadd.f32 %v855, %v874
    %v886 = vadd.f32 %v857, %v878
    %v887 = vmul.f32 %v883, 0.5
    %v888 = vtanh.pop %v887
    %v889 = vadd.f32 %v888, 1.0
    %v890 = vmul.f32 %v889, 0.5
    %v891 = vmul.f32 %v884, 0.5
    %v892 = vtanh.pop %v891
    %v893 = vadd.f32 %v892, 1.0
    %v894 = vmul.f32 %v893, 0.5
    %v895 = vtanh.pop %v885
    %v896 = vmul.f32 %v886, 0.5
    %v897 = vtanh.pop %v896
    %v898 = vadd.f32 %v897, 1.0
    %v899 = vmul.f32 %v898, 0.5
    %v900 = vld [vmem:[#allocation7] sm:$0xff]
    %v901 = vmul.f32 %v894, %v900
    %v902 = vmul.f32 %v890, %v895
    %v903 = vadd.f32 %v901, %v902
    %v904 = vtanh.pop %v903
    %v905 = vmul.f32 %v899, %v904
    %v906 = vpack.c.bf16 %v905, %v905
    %v907 = vld [vmem:[#allocation11] sm:$0xf]
    %v908 = vld [vmem:[#allocation11 + $0x4] sm:$0xf]
    %v909 = vld [vmem:[#allocation11 + $0x8] sm:$0xf]
    %v910 = vld [vmem:[#allocation11 + $0xc] sm:$0xf]
    %v911 = vld [vmem:[#allocation11 + $0x10] sm:$0xf]
    %v912 = vld [vmem:[#allocation11 + $0x14] sm:$0xf]
    %v913 = vld [vmem:[#allocation11 + $0x18] sm:$0xf]
    %v914 = vld [vmem:[#allocation11 + $0x1c] sm:$0xf]
    %v915 = vld [vmem:[#allocation11 + $0x20] sm:$0xf]
    %v916 = vld [vmem:[#allocation11 + $0x24] sm:$0xf]
    %v917 = vld [vmem:[#allocation11 + $0x28] sm:$0xf]
    %v918 = vld [vmem:[#allocation11 + $0x2c] sm:$0xf]
    %v919 = vld [vmem:[#allocation11 + $0x30] sm:$0xf]
    %v920 = vld [vmem:[#allocation11 + $0x34] sm:$0xf]
    %v921 = vld [vmem:[#allocation11 + $0x38] sm:$0xf]
    %v922 = vld [vmem:[#allocation11 + $0x3c] sm:$0xf]
    %v923 = vld [vmem:[%s7] sm:$0x1]
    %v925 = vlaneseq
    %v926 = vshrl.u32 %v925, 7
    %v927 = vsub.s32 0, %v926
    %v928 = vrot.slane %v923, %v927
    %v946 = vunpack.c.l.b16 %v907
    %v947 = vunpack.c.l.b16 %v908
    %v948 = vunpack.c.l.b16 %v909
    %v949 = vunpack.c.l.b16 %v910
    %v950 = vunpack.c.l.b16 %v911
    %v951 = vunpack.c.l.b16 %v912
    %v952 = vunpack.c.l.b16 %v913
    %v953 = vunpack.c.l.b16 %v914
    %v954 = vunpack.c.l.b16 %v915
    %v955 = vunpack.c.l.b16 %v916
    %v956 = vunpack.c.l.b16 %v917
    %v957 = vunpack.c.l.b16 %v918
    %v958 = vunpack.c.l.b16 %v919
    %v959 = vunpack.c.l.b16 %v920
    %v960 = vunpack.c.l.b16 %v921
    %v961 = vunpack.c.l.b16 %v922
    %v962 = vpack.c.b16 %v947, %v946
    %v963 = vpack.c.b16 %v949, %v948
    %v964 = vpack.c.b16 %v951, %v950
    %v965 = vpack.c.b16 %v953, %v952
    %v966 = vpack.c.b16 %v955, %v954
    %v967 = vpack.c.b16 %v957, %v956
    %v968 = vpack.c.b16 %v959, %v958
    %v969 = vpack.c.b16 %v961, %v960
    %978 = vmatprep.subr.bf16.mxu0 0
    %979 = vmatpush1.bf16.msra.mxu0 %v969
    %980 = vmatprep.subr.bf16.mxu0 0
    %981 = vmatpush1.bf16.msra.mxu0 %v968
    %982 = vmatprep.subr.bf16.mxu0 0
    %983 = vmatpush1.bf16.msra.mxu0 %v967
    %984 = vmatprep.subr.bf16.mxu0 0
    %985 = vmatpush1.bf16.msra.mxu0 %v966
    %986 = vmatprep.subr.bf16.mxu0 0
    %987 = vmatpush1.bf16.msra.mxu0 %v965
    %988 = vmatprep.subr.bf16.mxu0 0
    %989 = vmatpush1.bf16.msra.mxu0 %v964
    %990 = vmatprep.subr.bf16.mxu0 0
    %991 = vmatpush1.bf16.msra.mxu0 %v963
    %992 = vmatprep.subr.bf16.mxu0 0
    %993 = vmatpush1.bf16.msra.mxu0 %v962
    %994 = vmatprep.subr.bf16.mxu0 0
    %995 = vmatpush2.bf16.msra.mxu0 0
    %996 = vmatprep.subr.bf16.mxu0 0
    %997 = vmatpush2.bf16.msra.mxu0 0
    %998 = vmatprep.subr.bf16.mxu0 0
    %999 = vmatpush2.bf16.msra.mxu0 0
    %1000 = vmatprep.subr.bf16.mxu0 0
    %1001 = vmatpush2.bf16.msra.mxu0 0
    %1002 = vmatprep.subr.bf16.mxu0 0
    %1003 = vmatpush2.bf16.msra.mxu0 0
    %1004 = vmatprep.subr.bf16.mxu0 0
    %1005 = vmatpush2.bf16.msra.mxu0 0
    %1006 = vmatprep.subr.bf16.mxu0 0
    %1007 = vmatpush2.bf16.msra.mxu0 0
    %1008 = vmatprep.subr.bf16.mxu0 0
    %1009 = vmatpush2.bf16.msra.mxu0 0
    %1010 = vmatprep.mubr.bf16.mxu0 0
    %1011 = vmatmul.mubr.bf16.gmra.mxu0 %v906
    %v1012 = vpop.f32.mrf.mxu0
    %v1013 = vadd.f32 %v928, %v1012
    %v1014 = vpop.f32.mrf.mxu0
    %v1015 = vpop.f32.mrf.mxu0
    %v1016 = vpop.f32.mrf.mxu0
    %1017 = vdwg.mxu0
    %vm1018 = vcmp.gt.f32.partialorder %v1013, 0.0
    %v1019 = vmin.f32 %v1013, 0.0
    %v1020 = vmul.f32 %v1019, 1.442695
    %v1021 = vpow.pop %v1020
    %v1022 = vsub.f32 %v1021, 1.0
    %v1023 = vsel %vm1018, %v1013, %v1022
    %v1024 = vpack.c.bf16 %v1023, %v1023
    %v1025 = vld [vmem:[#allocation13] sm:$0xf]
    %v1026 = vld [vmem:[#allocation13 + $0x4] sm:$0xf]
    %v1027 = vld [vmem:[#allocation13 + $0x8] sm:$0xf]
    %v1028 = vld [vmem:[#allocation13 + $0xc] sm:$0xf]
    %v1029 = vld [vmem:[#allocation13 + $0x10] sm:$0xf]
    %v1030 = vld [vmem:[#allocation13 + $0x14] sm:$0xf]
    %v1031 = vld [vmem:[#allocation13 + $0x18] sm:$0xf]
    %v1032 = vld [vmem:[#allocation13 + $0x1c] sm:$0xf]
    %v1033 = vld [vmem:[#allocation13 + $0x20] sm:$0xf]
    %v1034 = vld [vmem:[#allocation13 + $0x24] sm:$0xf]
    %v1035 = vld [vmem:[#allocation13 + $0x28] sm:$0xf]
    %v1036 = vld [vmem:[#allocation13 + $0x2c] sm:$0xf]
    %v1037 = vld [vmem:[#allocation13 + $0x30] sm:$0xf]
    %v1038 = vld [vmem:[#allocation13 + $0x34] sm:$0xf]
    %v1039 = vld [vmem:[#allocation13 + $0x38] sm:$0xf]
    %v1040 = vld [vmem:[#allocation13 + $0x3c] sm:$0xf]
    %v1041 = vld [vmem:[%s9] sm:$0x1]
    %v1043 = vlaneseq
    %v1044 = vshrl.u32 %v1043, 7
    %v1045 = vsub.s32 0, %v1044
    %v1046 = vrot.slane %v1041, %v1045
    %v1064 = vunpack.c.l.b16 %v1025
    %v1065 = vunpack.c.l.b16 %v1026
    %v1066 = vunpack.c.l.b16 %v1027
    %v1067 = vunpack.c.l.b16 %v1028
    %v1068 = vunpack.c.l.b16 %v1029
    %v1069 = vunpack.c.l.b16 %v1030
    %v1070 = vunpack.c.l.b16 %v1031
    %v1071 = vunpack.c.l.b16 %v1032
    %v1072 = vunpack.c.l.b16 %v1033
    %v1073 = vunpack.c.l.b16 %v1034
    %v1074 = vunpack.c.l.b16 %v1035
    %v1075 = vunpack.c.l.b16 %v1036
    %v1076 = vunpack.c.l.b16 %v1037
    %v1077 = vunpack.c.l.b16 %v1038
    %v1078 = vunpack.c.l.b16 %v1039
    %v1079 = vunpack.c.l.b16 %v1040
    %v1080 = vpack.c.b16 %v1065, %v1064
    %v1081 = vpack.c.b16 %v1067, %v1066
    %v1082 = vpack.c.b16 %v1069, %v1068
    %v1083 = vpack.c.b16 %v1071, %v1070
    %v1084 = vpack.c.b16 %v1073, %v1072
    %v1085 = vpack.c.b16 %v1075, %v1074
    %v1086 = vpack.c.b16 %v1077, %v1076
    %v1087 = vpack.c.b16 %v1079, %v1078
    %1096 = vmatprep.subr.bf16.mxu0 0
    %1097 = vmatpush1.bf16.msra.mxu0 %v1087
    %1098 = vmatprep.subr.bf16.mxu0 0
    %1099 = vmatpush1.bf16.msra.mxu0 %v1086
    %1100 = vmatprep.subr.bf16.mxu0 0
    %1101 = vmatpush1.bf16.msra.mxu0 %v1085
    %1102 = vmatprep.subr.bf16.mxu0 0
    %1103 = vmatpush1.bf16.msra.mxu0 %v1084
    %1104 = vmatprep.subr.bf16.mxu0 0
    %1105 = vmatpush1.bf16.msra.mxu0 %v1083
    %1106 = vmatprep.subr.bf16.mxu0 0
    %1107 = vmatpush1.bf16.msra.mxu0 %v1082
    %1108 = vmatprep.subr.bf16.mxu0 0
    %1109 = vmatpush1.bf16.msra.mxu0 %v1081
    %1110 = vmatprep.subr.bf16.mxu0 0
    %1111 = vmatpush1.bf16.msra.mxu0 %v1080
    %1112 = vmatprep.subr.bf16.mxu0 0
    %1113 = vmatpush2.bf16.msra.mxu0 0
    %1114 = vmatprep.subr.bf16.mxu0 0
    %1115 = vmatpush2.bf16.msra.mxu0 0
    %1116 = vmatprep.subr.bf16.mxu0 0
    %1117 = vmatpush2.bf16.msra.mxu0 0
    %1118 = vmatprep.subr.bf16.mxu0 0
    %1119 = vmatpush2.bf16.msra.mxu0 0
    %1120 = vmatprep.subr.bf16.mxu0 0
    %1121 = vmatpush2.bf16.msra.mxu0 0
    %1122 = vmatprep.subr.bf16.mxu0 0
    %1123 = vmatpush2.bf16.msra.mxu0 0
    %1124 = vmatprep.subr.bf16.mxu0 0
    %1125 = vmatpush2.bf16.msra.mxu0 0
    %1126 = vmatprep.subr.bf16.mxu0 0
    %1127 = vmatpush2.bf16.msra.mxu0 0
    %1128 = vmatprep.mubr.bf16.mxu0 0
    %1129 = vmatmul.mubr.bf16.gmra.mxu0 %v1024
    %v1130 = vpop.f32.mrf.mxu0
    %v1131 = vadd.f32 %v1046, %v1130
    %v1132 = vpop.f32.mrf.mxu0
    %v1133 = vpop.f32.mrf.mxu0
    %v1134 = vpop.f32.mrf.mxu0
    %1135 = vdwg.mxu0
    %v1136 = vpack.c.bf16 %v1131, %v1131
    %v1137 = vld [vmem:[#allocation14] sm:$0xf]
    %v1138 = vld [vmem:[#allocation14 + $0x4] sm:$0xf]
    %v1139 = vld [vmem:[#allocation14 + $0x8] sm:$0xf]
    %v1140 = vld [vmem:[#allocation14 + $0xc] sm:$0xf]
    %v1141 = vld [vmem:[#allocation14 + $0x10] sm:$0xf]
    %v1142 = vld [vmem:[#allocation14 + $0x14] sm:$0xf]
    %v1143 = vld [vmem:[#allocation14 + $0x18] sm:$0xf]
    %v1144 = vld [vmem:[#allocation14 + $0x1c] sm:$0xf]
    %v1145 = vld [vmem:[#allocation14 + $0x20] sm:$0xf]
    %v1146 = vld [vmem:[#allocation14 + $0x24] sm:$0xf]
    %v1147 = vld [vmem:[#allocation14 + $0x28] sm:$0xf]
    %v1148 = vld [vmem:[#allocation14 + $0x2c] sm:$0xf]
    %v1149 = vld [vmem:[#allocation14 + $0x30] sm:$0xf]
    %v1150 = vld [vmem:[#allocation14 + $0x34] sm:$0xf]
    %v1151 = vld [vmem:[#allocation14 + $0x38] sm:$0xf]
    %v1152 = vld [vmem:[#allocation14 + $0x3c] sm:$0xf]
    %v1153 = vld [vmem:[%s11] sm:$0x1]
    %v1155 = vlaneseq
    %v1156 = vshrl.u32 %v1155, 7
    %v1157 = vsub.s32 0, %v1156
    %v1158 = vrot.slane %v1153, %v1157
    %v1176 = vunpack.c.l.b16 %v1137
    %v1177 = vunpack.c.l.b16 %v1138
    %v1178 = vunpack.c.l.b16 %v1139
    %v1179 = vunpack.c.l.b16 %v1140
    %v1180 = vunpack.c.l.b16 %v1141
    %v1181 = vunpack.c.l.b16 %v1142
    %v1182 = vunpack.c.l.b16 %v1143
    %v1183 = vunpack.c.l.b16 %v1144
    %v1184 = vunpack.c.l.b16 %v1145
    %v1185 = vunpack.c.l.b16 %v1146
    %v1186 = vunpack.c.l.b16 %v1147
    %v1187 = vunpack.c.l.b16 %v1148
    %v1188 = vunpack.c.l.b16 %v1149
    %v1189 = vunpack.c.l.b16 %v1150
    %v1190 = vunpack.c.l.b16 %v1151
    %v1191 = vunpack.c.l.b16 %v1152
    %v1192 = vpack.c.b16 %v1177, %v1176
    %v1193 = vpack.c.b16 %v1179, %v1178
    %v1194 = vpack.c.b16 %v1181, %v1180
    %v1195 = vpack.c.b16 %v1183, %v1182
    %v1196 = vpack.c.b16 %v1185, %v1184
    %v1197 = vpack.c.b16 %v1187, %v1186
    %v1198 = vpack.c.b16 %v1189, %v1188
    %v1199 = vpack.c.b16 %v1191, %v1190
    %1208 = vmatprep.subr.bf16.mxu0 0
    %1209 = vmatpush1.bf16.msra.mxu0 %v1199
    %1210 = vmatprep.subr.bf16.mxu0 0
    %1211 = vmatpush1.bf16.msra.mxu0 %v1198
    %1212 = vmatprep.subr.bf16.mxu0 0
    %1213 = vmatpush1.bf16.msra.mxu0 %v1197
    %1214 = vmatprep.subr.bf16.mxu0 0
    %1215 = vmatpush1.bf16.msra.mxu0 %v1196
    %1216 = vmatprep.subr.bf16.mxu0 0
    %1217 = vmatpush1.bf16.msra.mxu0 %v1195
    %1218 = vmatprep.subr.bf16.mxu0 0
    %1219 = vmatpush1.bf16.msra.mxu0 %v1194
    %1220 = vmatprep.subr.bf16.mxu0 0
    %1221 = vmatpush1.bf16.msra.mxu0 %v1193
    %1222 = vmatprep.subr.bf16.mxu0 0
    %1223 = vmatpush1.bf16.msra.mxu0 %v1192
    %1224 = vmatprep.subr.bf16.mxu0 0
    %1225 = vmatpush2.bf16.msra.mxu0 0
    %1226 = vmatprep.subr.bf16.mxu0 0
    %1227 = vmatpush2.bf16.msra.mxu0 0
    %1228 = vmatprep.subr.bf16.mxu0 0
    %1229 = vmatpush2.bf16.msra.mxu0 0
    %1230 = vmatprep.subr.bf16.mxu0 0
    %1231 = vmatpush2.bf16.msra.mxu0 0
    %1232 = vmatprep.subr.bf16.mxu0 0
    %1233 = vmatpush2.bf16.msra.mxu0 0
    %1234 = vmatprep.subr.bf16.mxu0 0
    %1235 = vmatpush2.bf16.msra.mxu0 0
    %1236 = vmatprep.subr.bf16.mxu0 0
    %1237 = vmatpush2.bf16.msra.mxu0 0
    %1238 = vmatprep.subr.bf16.mxu0 0
    %1239 = vmatpush2.bf16.msra.mxu0 0
    %1240 = vmatprep.mubr.bf16.mxu0 0
    %1241 = vmatmul.mubr.bf16.gmra.mxu0 %v1136
    %v1242 = vpop.f32.mrf.mxu0
    %v1243 = vadd.f32 %v1158, %v1242
    %v1244 = vpop.f32.mrf.mxu0
    %v1245 = vpop.f32.mrf.mxu0
    %v1246 = vpop.f32.mrf.mxu0
    %1247 = vdwg.mxu0
    %v1248 = vmul.f32 %v1243, 0.5
    %v1249 = vtanh.pop %v1248
    %v1250 = vadd.f32 %v1249, 1.0
    %v1251 = vmul.f32 %v1250, 0.5
    %v1252 = vmul.f32 %v1131, %v1251
    %v1253 = vsub.f32 1.0, %v1251
    %v1254 = vmul.f32 %v1253, %v905
    %v1255 = vadd.f32 %v1252, %v1254
    %v1256 = vpack.c.bf16 %v1255, %v1255
    %v1257 = vld [vmem:[#allocation16] sm:$0xff]
    %v1258 = vld [vmem:[#allocation16 + $0x8] sm:$0xff]
    %v1259 = vld [vmem:[#allocation16 + $0x10] sm:$0xff]
    %v1260 = vld [vmem:[#allocation16 + $0x18] sm:$0xff]
    %v1261 = vld [vmem:[#allocation16 + $0x20] sm:$0xff]
    %v1262 = vld [vmem:[#allocation16 + $0x28] sm:$0xff]
    %v1263 = vld [vmem:[#allocation16 + $0x30] sm:$0xff]
    %v1264 = vld [vmem:[#allocation16 + $0x38] sm:$0xff]
    %v1265 = vld [vmem:[#allocation16 + $0x40] sm:$0xff]
    %v1266 = vld [vmem:[#allocation16 + $0x48] sm:$0xff]
    %v1267 = vld [vmem:[#allocation16 + $0x50] sm:$0xff]
    %v1268 = vld [vmem:[#allocation16 + $0x58] sm:$0xff]
    %v1269 = vld [vmem:[#allocation16 + $0x60] sm:$0xff]
    %v1270 = vld [vmem:[#allocation16 + $0x68] sm:$0xff]
    %v1271 = vld [vmem:[#allocation16 + $0x70] sm:$0xff]
    %v1272 = vld [vmem:[#allocation16 + $0x78] sm:$0xff]
    %v1273 = vld [vmem:[%s13] sm:$0x3]
    %v1275 = vlaneseq
    %v1276 = vshrl.u32 %v1275, 7
    %v1277 = vsub.s32 0, %v1276
    %v1278 = vrot.slane %v1273, %v1277
    %v1279 = vlaneseq
    %v1280 = vshrl.u32 %v1279, 7
    %v1281 = vsub.s32 1, %v1280
    %v1282 = vrot.slane %v1273, %v1281
    %v1301 = vunpack.c.l.b16 %v1257
    %v1302 = vunpack.c.h.b16 %v1257
    %v1303 = vunpack.c.l.b16 %v1258
    %v1304 = vunpack.c.h.b16 %v1258
    %v1305 = vunpack.c.l.b16 %v1259
    %v1306 = vunpack.c.h.b16 %v1259
    %v1307 = vunpack.c.l.b16 %v1260
    %v1308 = vunpack.c.h.b16 %v1260
    %v1309 = vunpack.c.l.b16 %v1261
    %v1310 = vunpack.c.h.b16 %v1261
    %v1311 = vunpack.c.l.b16 %v1262
    %v1312 = vunpack.c.h.b16 %v1262
    %v1313 = vunpack.c.l.b16 %v1263
    %v1314 = vunpack.c.h.b16 %v1263
    %v1315 = vunpack.c.l.b16 %v1264
    %v1316 = vunpack.c.h.b16 %v1264
    %v1317 = vunpack.c.l.b16 %v1265
    %v1318 = vunpack.c.h.b16 %v1265
    %v1319 = vunpack.c.l.b16 %v1266
    %v1320 = vunpack.c.h.b16 %v1266
    %v1321 = vunpack.c.l.b16 %v1267
    %v1322 = vunpack.c.h.b16 %v1267
    %v1323 = vunpack.c.l.b16 %v1268
    %v1324 = vunpack.c.h.b16 %v1268
    %v1325 = vunpack.c.l.b16 %v1269
    %v1326 = vunpack.c.h.b16 %v1269
    %v1327 = vunpack.c.l.b16 %v1270
    %v1328 = vunpack.c.h.b16 %v1270
    %v1329 = vunpack.c.l.b16 %v1271
    %v1330 = vunpack.c.h.b16 %v1271
    %v1331 = vunpack.c.l.b16 %v1272
    %v1332 = vunpack.c.h.b16 %v1272
    %v1333 = vpack.c.b16 %v1303, %v1301
    %v1334 = vpack.c.b16 %v1304, %v1302
    %v1335 = vpack.c.b16 %v1307, %v1305
    %v1336 = vpack.c.b16 %v1308, %v1306
    %v1337 = vpack.c.b16 %v1311, %v1309
    %v1338 = vpack.c.b16 %v1312, %v1310
    %v1339 = vpack.c.b16 %v1315, %v1313
    %v1340 = vpack.c.b16 %v1316, %v1314
    %v1341 = vpack.c.b16 %v1319, %v1317
    %v1342 = vpack.c.b16 %v1320, %v1318
    %v1343 = vpack.c.b16 %v1323, %v1321
    %v1344 = vpack.c.b16 %v1324, %v1322
    %v1345 = vpack.c.b16 %v1327, %v1325
    %v1346 = vpack.c.b16 %v1328, %v1326
    %v1347 = vpack.c.b16 %v1331, %v1329
    %v1348 = vpack.c.b16 %v1332, %v1330
    %1365 = vmatprep.subr.bf16.mxu0 %v1348
    %1366 = vmatpush1.bf16.msra.mxu0 %v1347
    %1367 = vmatprep.subr.bf16.mxu0 %v1346
    %1368 = vmatpush1.bf16.msra.mxu0 %v1345
    %1369 = vmatprep.subr.bf16.mxu0 %v1344
    %1370 = vmatpush1.bf16.msra.mxu0 %v1343
    %1371 = vmatprep.subr.bf16.mxu0 %v1342
    %1372 = vmatpush1.bf16.msra.mxu0 %v1341
    %1373 = vmatprep.subr.bf16.mxu0 %v1340
    %1374 = vmatpush1.bf16.msra.mxu0 %v1339
    %1375 = vmatprep.subr.bf16.mxu0 %v1338
    %1376 = vmatpush1.bf16.msra.mxu0 %v1337
    %1377 = vmatprep.subr.bf16.mxu0 %v1336
    %1378 = vmatpush1.bf16.msra.mxu0 %v1335
    %1379 = vmatprep.subr.bf16.mxu0 %v1334
    %1380 = vmatpush1.bf16.msra.mxu0 %v1333
    %1381 = vmatprep.subr.bf16.mxu0 0
    %1382 = vmatpush2.bf16.msra.mxu0 0
    %1383 = vmatprep.subr.bf16.mxu0 0
    %1384 = vmatpush2.bf16.msra.mxu0 0
    %1385 = vmatprep.subr.bf16.mxu0 0
    %1386 = vmatpush2.bf16.msra.mxu0 0
    %1387 = vmatprep.subr.bf16.mxu0 0
    %1388 = vmatpush2.bf16.msra.mxu0 0
    %1389 = vmatprep.subr.bf16.mxu0 0
    %1390 = vmatpush2.bf16.msra.mxu0 0
    %1391 = vmatprep.subr.bf16.mxu0 0
    %1392 = vmatpush2.bf16.msra.mxu0 0
    %1393 = vmatprep.subr.bf16.mxu0 0
    %1394 = vmatpush2.bf16.msra.mxu0 0
    %1395 = vmatprep.subr.bf16.mxu0 0
    %1396 = vmatpush2.bf16.msra.mxu0 0
    %1397 = vmatprep.mubr.bf16.mxu0 0
    %1398 = vmatmul.mubr.bf16.gmra.mxu0 %v1256
    %v1399 = vpop.f32.mrf.mxu0
    %v1400 = vadd.f32 %v1278, %v1399
    %v1401 = vpop.f32.mrf.mxu0
    %v1402 = vadd.f32 %v1282, %v1401
    %v1403 = vpop.f32.mrf.mxu0
    %v1404 = vpop.f32.mrf.mxu0
    %1405 = vdwg.mxu0
    %1406 = vst [vmem:[#allocation17] sm:$0xff] %v1400
    %1407 = vst [vmem:[#allocation17 + $0x8] sm:$0xff] %v1402
    // Predicated region
    $region94: #{tft_decoder_apply.1} parent=1 // pred_check
      _
    $region95: #{tft_decoder_apply.1} parent=1 // pred_check_branch
      %1409 = sbr.rel (0) target = $region97
    $region96: #{tft_decoder_apply.1} parent=1 // pred_region
      %s1411 = ssub.s32 256, 256
      %1412 = vsyncadd [#allocation4], %s1411
      %s1414 = sshll.u32 [#allocation17], 4
      %s1415 = int_to_ptr.vmem [resolvable:$true] %s1414
      %1417 = dma.vmem_to_hbm [thread:$0]  %s1415, 256, %s14, [#allocation4]
    $region97: #{tft_decoder_apply.1} parent=1 // pred_fallthru
      _
    // Predicated region
    $region98: #{tft_decoder_apply.1} parent=1 // pred_check
      _
    $region99: #{tft_decoder_apply.1} parent=1 // pred_check_branch
      %1419 = sbr.rel (0) target = $region101
    $region100: #{tft_decoder_apply.1} parent=1 // pred_region
      %1420 = dma.done [#allocation4], 256
    $region101: #{tft_decoder_apply.1} parent=1 // pred_fallthru
      _
    %1421 = vsyncpa [#allocation3], 1
    %1422 = vsyncpa [#allocation6], 1
    %1423 = vsyncpa [#allocation9], 1
    %1424 = vsyncpa [#allocation12], 1
    %1425 = vsyncpa [#allocation15], 1
    %1426 = vsyncpa [#allocation4], 1

</llo_original>
